<compile_context>
chip_gen: v7x
topology: tpu7x:2x2x1
jax: 0.10.0
libtpu: 0.0.40
codegen_flags: <defaults>
</compile_context>

<pallas_src>
import functools

import jax
import jax.numpy as jnp
from jax.experimental import pallas as pl
from jax.experimental.pallas import tpu as pltpu


def _geodesic_distance_kernel(x_ref, y_ref, g_ref, dist_ref, *,
                              identity_metric=False):
    # x_ref, y_ref: (D, Bt) -- manifold dim on sublanes, pairs on lanes.
    # g_ref:        (D, D)  -- metric tensor.
    # dist_ref:     (1, Bt) -- lane-dense output row.
    D, Bt = x_ref.shape
    x = x_ref[...]
    y = y_ref[...]

    # Only mask left: selects the (recomputed) time row back into a vector.
    is_time = jax.lax.broadcasted_iota(jnp.int32, (D, Bt), 0) == 0

    def row0(a):
        return a[0:1, :]

    def full_dot(a, b):                       # (1, Bt) sublane reduce
        return jnp.sum(a * b, axis=0, keepdims=True)

    # Spatial (index 1:) sums = full reduce minus the time term (no masks).
    x0r, y0r = row0(x), row0(y)
    x_sp = full_dot(x, x) - x0r * x0r
    y_sp = full_dot(y, y) - y0r * y0r

    def project_to_hyperboloid(a, a0, a_sp):
        # t = 0.9 * ||a_space||     if spacelike (a_sp > a0^2)
        #     sqrt(1 + ||a_space||^2) otherwise
        t = jnp.where(a_sp > a0 * a0, jnp.sqrt(a_sp) * 0.9,
                      jnp.sqrt(1.0 + a_sp))
        return jnp.where(is_time, t, a), t

    # Spatial components are untouched by the projection, so x_sp/y_sp double
    # as the spatial sums of x_h/y_h.
    x_h, x0 = project_to_hyperboloid(x, x0r, x_sp)
    y_h, y0 = project_to_hyperboloid(y, y0r, y_sp)
    x_spacelike = x_sp > x0 * x0
    y_spacelike = y_sp > y0 * y0

    # per-pair torch.allclose(x_h, y_h, atol=1e-7) (default rtol=1e-5)
    slack = jnp.abs(x_h - y_h) - 1e-5 * jnp.abs(y_h)
    allclose_xy = jnp.max(slack, axis=0, keepdims=True) <= 1e-7       # (1, Bt)

    # Minkowski inner product <x_h, y_h>; spacelike/spacelike drops the time
    # term, exactly as the reference implementation does.
    space_xy = full_dot(x_h, y_h) - x0 * y0
    inner_xy = jnp.where(jnp.logical_and(x_spacelike, y_spacelike),
                         space_xy, space_xy - x0 * y0)
    inner = jnp.clip(-inner_xy, 1.0 + 1e-7, 5.0)
    # acosh(z) = log(z + sqrt(z^2 - 1)), z >= 1+1e-7 after the clamp; the torch
    # `dist <= 1e-7` early exit is therefore dead and omitted.
    dist_h = jnp.log(inner + jnp.sqrt(inner * inner - 1.0))           # (1, Bt)

    # Hoisted base-point normalization a_n = x_h / sqrt(|<x_h,x_h>|).
    # (project_to_hyperboloid is idempotent, so both project_to_tangent calls
    # share it.)  Row quantities use exact sqrt / divide: they are (1, Bt)
    # ops, so the EUP cost is negligible and float32 parity is preserved.
    inner_xx = jnp.where(x_spacelike, x_sp, x_sp - x0 * x0)
    s = 1.0 / jnp.sqrt(jnp.abs(inner_xx))
    a_n = x_h * s                                                     # (D, Bt)
    an0 = x0 * s
    an_spacelike = (x_sp * s * s) > an0 * an0
    inv_an0 = 1.0 / an0

    def project_to_tangent(v, v0, v_spacelike):
        space_av = full_dot(a_n, v) - an0 * v0
        inner_av = jnp.where(jnp.logical_and(an_spacelike, v_spacelike),
                             space_av, space_av - an0 * v0)
        v_proj = v + inner_av * a_n
        vp0 = row0(v_proj)
        vp_spsq = full_dot(v_proj, v_proj) - vp0 * vp0
        sp_norm = jnp.maximum(jnp.sqrt(jnp.maximum(vp_spsq, 0.0)), 1e-7)
        inv_sp = 1.0 / sp_norm
        v_space = v_proj * inv_sp          # time row overwritten below
        space_at = full_dot(a_n, v_space) - an0 * row0(v_space)
        t_comp = space_at * inv_an0
        return jnp.where(is_time, t_comp, v_space), t_comp

    # ---------------- HyperbolicLogarithm.forward(x, y) ----------------
    y_tan, yt0 = project_to_tangent(y_h, y0, y_spacelike)
    yt_sp = full_dot(y_tan, y_tan) - yt0 * yt0
    yt_spacelike = yt_sp > yt0 * yt0
    inner_tt = jnp.where(yt_spacelike, yt_sp, yt_sp - yt0 * yt0)
    # minkowski_norm clamps to 1e-12 before sqrt; the later 1e-7 clamp is then
    # a no-op (sqrt(1e-12) = 1e-6), kept for fidelity.
    y_tan_norm = jnp.maximum(jnp.sqrt(jnp.maximum(inner_tt, 1e-12)), 1e-7)
    scale = jnp.clip(dist_h / y_tan_norm, -5.0, 5.0)                  # > 0

    v2 = scale * y_tan
    # scale > 0 always, so v2's spacelike test equals y_tan's (row-level reuse).
    v_main, _ = project_to_tangent(v2, scale * yt0, yt_spacelike)
    v_log = jnp.where(allclose_xy, 0.0, v_main)

    # -------- geodesic distance sqrt(|v^T G v|), batched over lanes --------
    if identity_metric:
        quad = full_dot(v_log, v_log)          # skip the tiny-K MXU dot
    else:
        gv = jnp.dot(g_ref[...], v_log, preferred_element_type=jnp.float32)
        quad = full_dot(gv, v_log)
    dist_ref[...] = jnp.sqrt(jnp.abs(quad))


def _round_up(a, m):
    return ((a + m - 1) // m) * m


def geometric_distance_batch(x, y, metric, *, block_b=2048,
                             transposed_inputs=False,
                             assume_identity_metric=False,
                             vmem_limit_bytes=None):
    """Geodesic distances for a batch of pairs.

    x, y: (B, D) float arrays (or (D, B) if transposed_inputs=True); returns (B,) f32.
    """
    x = jnp.asarray(x, jnp.float32)
    y = jnp.asarray(y, jnp.float32)
    metric = jnp.asarray(metric, jnp.float32)

    if transposed_inputs:
        D, B = x.shape
        x_t, y_t = x, y
    else:
        B, D = x.shape
        # TODO(synk): callers that already hold (D, B)-layout data should pass
        # transposed_inputs=True and skip this XLA transpose pass entirely.
        x_t, y_t = x.T, y.T

    # Lane-dense batch tile: large (>=512, multiple of 512) so per-grid-step
    # pipeline overhead is amortized and the output store is unmasked.
    block_b = min(block_b, max(512, _round_up(B, 512)))
    # Keep >= 2 grid steps when there is enough work so both v7x TensorCores
    # get fed (harmless on single-TC v5e/v6e).
    if B > 512 and pl.cdiv(B, block_b) < 2:
        block_b = max(512, _round_up(pl.cdiv(B, 2), 512))

    nb = pl.cdiv(B, block_b)
    b_pad = nb * block_b
    pad = b_pad - B
    if pad:
        x_t = jnp.pad(x_t, ((0, 0), (0, pad)))
        y_t = jnp.pad(y_t, ((0, 0), (0, pad)))

    cp_kwargs = {"dimension_semantics": ("parallel",)}
    if vmem_limit_bytes is not None:
        # Only needed if block_b is pushed very wide (>=16K lanes).
        cp_kwargs["vmem_limit_bytes"] = vmem_limit_bytes

    kernel = functools.partial(_geodesic_distance_kernel,
                               identity_metric=assume_identity_metric)

    dist = pl.pallas_call(
        kernel,
        out_shape=jax.ShapeDtypeStruct((1, b_pad), jnp.float32),
        grid=(nb,),
        in_specs=[
            pl.BlockSpec((D, block_b), lambda i: (0, i)),
            pl.BlockSpec((D, block_b), lambda i: (0, i)),
            pl.BlockSpec((D, D), lambda i: (0, 0)),
        ],
        out_specs=pl.BlockSpec((1, block_b), lambda i: (0, i)),
        compiler_params=pltpu.CompilerParams(**cp_kwargs),
    )(x_t, y_t, metric)
    return dist[0, :B]


def geometric_structures_forward(x, y, metric):
    """Pallas implementation of GeometricStructures.forward(x, y) (single pair)."""
    d = geometric_distance_batch(jnp.reshape(x, (1, -1)),
                                 jnp.reshape(y, (1, -1)), metric)
    return {"distance": d[0]}


# ----------------------- pure-JAX reference (for sanity) -----------------------
def _ref_forward(x, y, metric):
    def mink_inner(a, b):
        ti = a[0] * b[0]
        si = jnp.sum(a[1:] * b[1:])
        a_sp = jnp.sum(a[1:] ** 2)
        b_sp = jnp.sum(b[1:] ** 2)
        both = jnp.logical_and(a_sp > a[0] ** 2, b_sp > b[0] ** 2)
        return jnp.where(both, si, -ti + si)

    def proj_h(a):
        sn = jnp.sqrt(jnp.sum(a[1:] ** 2))
        t = jnp.where(sn > jnp.abs(a[0]), sn * 0.9, jnp.sqrt(1.0 + sn ** 2))
        return jnp.concatenate([t[None], a[1:]])

    def proj_t(a, v):
        a_h = proj_h(a)
        a_n = a_h / jnp.sqrt(jnp.abs(mink_inner(a_h, a_h)))
        vp = v + mink_inner(a_n, v) * a_n
        sn = jnp.maximum(jnp.sqrt(jnp.sum(vp[1:] ** 2)), 1e-7)
        vs = vp[1:] / sn
        t0 = jnp.sum(a_n[1:] * vs) / a_n[0]
        return jnp.concatenate([t0[None], vs])

    x_h, y_h = proj_h(x), proj_h(y)
    allc = jnp.all(jnp.abs(x_h - y_h) <= (1e-7 + 1e-5 * jnp.abs(y_h)))
    inner = jnp.clip(-mink_inner(x_h, y_h), 1.0 + 1e-7, 5.0)
    dist_h = jnp.log(inner + jnp.sqrt(inner * inner - 1.0))
    y_tan = proj_t(x_h, y_h)
    ytn = jnp.maximum(jnp.sqrt(jnp.maximum(mink_inner(y_tan, y_tan), 1e-12)), 1e-7)
    scale = jnp.clip(dist_h / ytn, -5.0, 5.0)
    v_main = proj_t(x_h, scale * y_tan)
    v_small = proj_t(x_h, y_h - x_h)
    v_log = jnp.where(allc, jnp.zeros_like(x_h),
                      jnp.where(dist_h <= 1e-7, v_small, v_main))
    return jnp.sqrt(jnp.abs(v_log @ metric @ v_log))


if __name__ == "__main__":
    dim = 16
    key = jax.random.PRNGKey(0)
    kx, ky, kbx, kby = jax.random.split(key, 4)

    # Parameters per GeometricStructures.__init__ (deterministic):
    metric = jnp.eye(dim, dtype=jnp.float32)          # nn.Parameter(torch.eye(dim))
    # connection / curvature_tensor are zeros and unused by the default forward.

    # --- single pair: matches GeometricStructures.forward(x, y) semantics ---
    x = jax.random.normal(kx, (dim,), dtype=jnp.float32)
    y = jax.random.normal(ky, (dim,), dtype=jnp.float32)
    out = geometric_structures_forward(x, y, metric)
    dist = jax.block_until_ready(out["distance"])
    ref = _ref_forward(x, y, metric)
    assert jnp.allclose(dist, ref, rtol=2e-3, atol=2e-3), (float(dist), float(ref))

    # --- small batch: exercises the lane-dense batched path, grid + padding ---
    B = 200
    xb = jax.random.normal(kbx, (B, dim), dtype=jnp.float32)
    yb = jax.random.normal(kby, (B, dim), dtype=jnp.float32)
    db = jax.block_until_ready(geometric_distance_batch(xb, yb, metric))
    refb = jax.vmap(lambda a, b: _ref_forward(a, b, metric))(xb, yb)
    assert db.shape == (B,)
    err = float(jnp.max(jnp.abs(db - refb)))
    assert jnp.allclose(db, refb, rtol=2e-3, atol=2e-3), err

    # --- identity-metric fast path (metric is eye(dim) at init) ---
    db_id = jax.block_until_ready(
        geometric_distance_batch(xb, yb, metric, assume_identity_metric=True))
    err_id = float(jnp.max(jnp.abs(db_id - refb)))
    assert jnp.allclose(db_id, refb, rtol=2e-3, atol=2e-3), err_id

    print("KERNEL_OK")
</pallas_src>

<mosaic_0001>
module attributes {stable_mosaic.version = 11 : i64} {
  func.func @_geodesic_distance_kernel(%arg0: i32, %arg1: memref<16x512xf32, #tpu.memory_space<vmem>>, %arg2: memref<16x512xf32, #tpu.memory_space<vmem>>, %arg3: memref<16x16xf32, #tpu.memory_space<vmem>>, %arg4: memref<1x512xf32, #tpu.memory_space<vmem>>) attributes {dimension_semantics = [#tpu.dimension_semantics<parallel>], iteration_bounds = array<i64: 1>, scalar_prefetch = 0 : i64, scratch_operands = 0 : i64, tpu.core_type = #tpu.core_type<tc>, window_params = [{transform_indices = @transform_0, window_bounds = array<i64: 16, 512>}, {transform_indices = @transform_1, window_bounds = array<i64: 16, 512>}, {pipeline_mode = #tpu.pipeline_mode<synchronous>, transform_indices = @transform_2, window_bounds = array<i64: 16, 16>}, {transform_indices = @transform_3, window_bounds = array<i64: 1, 512>}]} {
    %c0 = arith.constant 0 : index
    %c0_0 = arith.constant 0 : index
    %0 = vector.load %arg1[%c0, %c0_0] : memref<16x512xf32, #tpu.memory_space<vmem>>, vector<16x512xf32>
    %c0_1 = arith.constant 0 : index
    %c0_2 = arith.constant 0 : index
    %1 = vector.load %arg2[%c0_1, %c0_2] : memref<16x512xf32, #tpu.memory_space<vmem>>, vector<16x512xf32>
    %2 = tpu.iota {dimensions = array<i32: 0>} : vector<16x512xi32>
    %c0_i32 = arith.constant 0 : i32
    %3 = vector.broadcast %c0_i32 : i32 to vector<16x512xi32>
    %4 = arith.cmpi eq, %2, %3 : vector<16x512xi32>
    %5 = vector.extract_strided_slice %0 {offsets = [0, 0], sizes = [1, 512], strides = [1, 1]} : vector<16x512xf32> to vector<1x512xf32>
    %6 = vector.extract_strided_slice %1 {offsets = [0, 0], sizes = [1, 512], strides = [1, 1]} : vector<16x512xf32> to vector<1x512xf32>
    %7 = arith.mulf %0, %0 : vector<16x512xf32>
    %cst = arith.constant dense<0.000000e+00> : vector<512xf32>
    %8 = vector.multi_reduction <add>, %7, %cst [0] : vector<16x512xf32> to vector<512xf32>
    %9 = vector.shape_cast %8 : vector<512xf32> to vector<1x512xf32>
    %10 = arith.mulf %5, %5 : vector<1x512xf32>
    %11 = arith.subf %9, %10 : vector<1x512xf32>
    %12 = arith.mulf %1, %1 : vector<16x512xf32>
    %cst_3 = arith.constant dense<0.000000e+00> : vector<512xf32>
    %13 = vector.multi_reduction <add>, %12, %cst_3 [0] : vector<16x512xf32> to vector<512xf32>
    %14 = vector.shape_cast %13 : vector<512xf32> to vector<1x512xf32>
    %15 = arith.mulf %6, %6 : vector<1x512xf32>
    %16 = arith.subf %14, %15 : vector<1x512xf32>
    %17 = arith.mulf %5, %5 : vector<1x512xf32>
    %18 = arith.cmpf ogt, %11, %17 : vector<1x512xf32>
    %19 = math.sqrt %11 : vector<1x512xf32>
    %cst_4 = arith.constant 0.899999976 : f32
    %20 = vector.broadcast %cst_4 : f32 to vector<1x512xf32>
    %21 = arith.mulf %19, %20 : vector<1x512xf32>
    %cst_5 = arith.constant 1.000000e+00 : f32
    %22 = vector.broadcast %cst_5 : f32 to vector<1x512xf32>
    %23 = arith.addf %22, %11 : vector<1x512xf32>
    %24 = math.sqrt %23 : vector<1x512xf32>
    %25 = arith.select %18, %21, %24 : vector<1x512xi1>, vector<1x512xf32>
    %26 = vector.shape_cast %25 : vector<1x512xf32> to vector<1x512xf32>
    %27 = vector.broadcast %26 : vector<1x512xf32> to vector<16x512xf32>
    %28 = arith.select %4, %27, %0 : vector<16x512xi1>, vector<16x512xf32>
    %29 = arith.mulf %6, %6 : vector<1x512xf32>
    %30 = arith.cmpf ogt, %16, %29 : vector<1x512xf32>
    %31 = math.sqrt %16 : vector<1x512xf32>
    %cst_6 = arith.constant 0.899999976 : f32
    %32 = vector.broadcast %cst_6 : f32 to vector<1x512xf32>
    %33 = arith.mulf %31, %32 : vector<1x512xf32>
    %cst_7 = arith.constant 1.000000e+00 : f32
    %34 = vector.broadcast %cst_7 : f32 to vector<1x512xf32>
    %35 = arith.addf %34, %16 : vector<1x512xf32>
    %36 = math.sqrt %35 : vector<1x512xf32>
    %37 = arith.select %30, %33, %36 : vector<1x512xi1>, vector<1x512xf32>
    %38 = vector.shape_cast %37 : vector<1x512xf32> to vector<1x512xf32>
    %39 = vector.broadcast %38 : vector<1x512xf32> to vector<16x512xf32>
    %40 = arith.select %4, %39, %1 : vector<16x512xi1>, vector<16x512xf32>
    %41 = arith.mulf %25, %25 : vector<1x512xf32>
    %42 = arith.cmpf ogt, %11, %41 : vector<1x512xf32>
    %43 = arith.mulf %37, %37 : vector<1x512xf32>
    %44 = arith.cmpf ogt, %16, %43 : vector<1x512xf32>
    %45 = arith.subf %28, %40 : vector<16x512xf32>
    %46 = math.absf %45 : vector<16x512xf32>
    %47 = math.absf %40 : vector<16x512xf32>
    %cst_8 = arith.constant 9.99999974E-6 : f32
    %48 = vector.broadcast %cst_8 : f32 to vector<16x512xf32>
    %49 = arith.mulf %48, %47 : vector<16x512xf32>
    %50 = arith.subf %46, %49 : vector<16x512xf32>
    %cst_9 = arith.constant dense<0xFF800000> : vector<512xf32>
    %51 = vector.multi_reduction <maximumf>, %50, %cst_9 [0] : vector<16x512xf32> to vector<512xf32>
    %52 = vector.shape_cast %51 : vector<512xf32> to vector<1x512xf32>
    %cst_10 = arith.constant 1.000000e-07 : f32
    %53 = vector.broadcast %cst_10 : f32 to vector<1x512xf32>
    %54 = arith.cmpf ole, %52, %53 : vector<1x512xf32>
    %55 = arith.mulf %28, %40 : vector<16x512xf32>
    %cst_11 = arith.constant dense<0.000000e+00> : vector<512xf32>
    %56 = vector.multi_reduction <add>, %55, %cst_11 [0] : vector<16x512xf32> to vector<512xf32>
    %57 = vector.shape_cast %56 : vector<512xf32> to vector<1x512xf32>
    %58 = arith.mulf %25, %37 : vector<1x512xf32>
    %59 = arith.subf %57, %58 : vector<1x512xf32>
    %60 = arith.andi %42, %44 : vector<1x512xi1>
    %61 = arith.mulf %25, %37 : vector<1x512xf32>
    %62 = arith.subf %59, %61 : vector<1x512xf32>
    %63 = arith.select %60, %59, %62 : vector<1x512xi1>, vector<1x512xf32>
    %cst_12 = arith.constant 0.000000e+00 : f32
    %64 = vector.broadcast %cst_12 : f32 to vector<1x512xf32>
    %65 = arith.subf %64, %63 : vector<1x512xf32>
    %cst_13 = arith.constant 1.00000012 : f32
    %cst_14 = arith.constant 5.000000e+00 : f32
    %66 = vector.broadcast %cst_13 : f32 to vector<1x512xf32>
    %67 = arith.maximumf %66, %65 : vector<1x512xf32>
    %68 = vector.broadcast %cst_14 : f32 to vector<1x512xf32>
    %69 = arith.minimumf %68, %67 : vector<1x512xf32>
    %70 = arith.mulf %69, %69 : vector<1x512xf32>
    %cst_15 = arith.constant 1.000000e+00 : f32
    %71 = vector.broadcast %cst_15 : f32 to vector<1x512xf32>
    %72 = arith.subf %70, %71 : vector<1x512xf32>
    %73 = math.sqrt %72 : vector<1x512xf32>
    %74 = arith.addf %69, %73 : vector<1x512xf32>
    %75 = math.log %74 : vector<1x512xf32>
    %76 = arith.mulf %25, %25 : vector<1x512xf32>
    %77 = arith.subf %11, %76 : vector<1x512xf32>
    %78 = arith.select %42, %11, %77 : vector<1x512xi1>, vector<1x512xf32>
    %79 = math.absf %78 : vector<1x512xf32>
    %80 = math.sqrt %79 : vector<1x512xf32>
    %cst_16 = arith.constant 1.000000e+00 : f32
    %81 = vector.broadcast %cst_16 : f32 to vector<1x512xf32>
    %82 = arith.divf %81, %80 : vector<1x512xf32>
    %83 = vector.broadcast %82 : vector<1x512xf32> to vector<16x512xf32>
    %84 = arith.mulf %28, %83 : vector<16x512xf32>
    %85 = arith.mulf %25, %82 : vector<1x512xf32>
    %86 = arith.mulf %11, %82 : vector<1x512xf32>
    %87 = arith.mulf %86, %82 : vector<1x512xf32>
    %88 = arith.mulf %85, %85 : vector<1x512xf32>
    %89 = arith.cmpf ogt, %87, %88 : vector<1x512xf32>
    %cst_17 = arith.constant 1.000000e+00 : f32
    %90 = vector.broadcast %cst_17 : f32 to vector<1x512xf32>
    %91 = arith.divf %90, %85 : vector<1x512xf32>
    %92 = arith.mulf %84, %40 : vector<16x512xf32>
    %cst_18 = arith.constant dense<0.000000e+00> : vector<512xf32>
    %93 = vector.multi_reduction <add>, %92, %cst_18 [0] : vector<16x512xf32> to vector<512xf32>
    %94 = vector.shape_cast %93 : vector<512xf32> to vector<1x512xf32>
    %95 = arith.mulf %85, %37 : vector<1x512xf32>
    %96 = arith.subf %94, %95 : vector<1x512xf32>
    %97 = arith.andi %89, %44 : vector<1x512xi1>
    %98 = arith.mulf %85, %37 : vector<1x512xf32>
    %99 = arith.subf %96, %98 : vector<1x512xf32>
    %100 = arith.select %97, %96, %99 : vector<1x512xi1>, vector<1x512xf32>
    %101 = vector.broadcast %100 : vector<1x512xf32> to vector<16x512xf32>
    %102 = arith.mulf %101, %84 : vector<16x512xf32>
    %103 = arith.addf %40, %102 : vector<16x512xf32>
    %104 = vector.extract_strided_slice %103 {offsets = [0, 0], sizes = [1, 512], strides = [1, 1]} : vector<16x512xf32> to vector<1x512xf32>
    %105 = arith.mulf %103, %103 : vector<16x512xf32>
    %cst_19 = arith.constant dense<0.000000e+00> : vector<512xf32>
    %106 = vector.multi_reduction <add>, %105, %cst_19 [0] : vector<16x512xf32> to vector<512xf32>
    %107 = vector.shape_cast %106 : vector<512xf32> to vector<1x512xf32>
    %108 = arith.mulf %104, %104 : vector<1x512xf32>
    %109 = arith.subf %107, %108 : vector<1x512xf32>
    %cst_20 = arith.constant 0.000000e+00 : f32
    %110 = vector.broadcast %cst_20 : f32 to vector<1x512xf32>
    %111 = arith.maximumf %109, %110 : vector<1x512xf32>
    %112 = math.sqrt %111 : vector<1x512xf32>
    %cst_21 = arith.constant 1.000000e-07 : f32
    %113 = vector.broadcast %cst_21 : f32 to vector<1x512xf32>
    %114 = arith.maximumf %112, %113 : vector<1x512xf32>
    %cst_22 = arith.constant 1.000000e+00 : f32
    %115 = vector.broadcast %cst_22 : f32 to vector<1x512xf32>
    %116 = arith.divf %115, %114 : vector<1x512xf32>
    %117 = vector.broadcast %116 : vector<1x512xf32> to vector<16x512xf32>
    %118 = arith.mulf %103, %117 : vector<16x512xf32>
    %119 = arith.mulf %84, %118 : vector<16x512xf32>
    %cst_23 = arith.constant dense<0.000000e+00> : vector<512xf32>
    %120 = vector.multi_reduction <add>, %119, %cst_23 [0] : vector<16x512xf32> to vector<512xf32>
    %121 = vector.shape_cast %120 : vector<512xf32> to vector<1x512xf32>
    %122 = vector.extract_strided_slice %118 {offsets = [0, 0], sizes = [1, 512], strides = [1, 1]} : vector<16x512xf32> to vector<1x512xf32>
    %123 = arith.mulf %85, %122 : vector<1x512xf32>
    %124 = arith.subf %121, %123 : vector<1x512xf32>
    %125 = arith.mulf %124, %91 : vector<1x512xf32>
    %126 = vector.shape_cast %125 : vector<1x512xf32> to vector<1x512xf32>
    %127 = vector.broadcast %126 : vector<1x512xf32> to vector<16x512xf32>
    %128 = arith.select %4, %127, %118 : vector<16x512xi1>, vector<16x512xf32>
    %129 = arith.mulf %128, %128 : vector<16x512xf32>
    %cst_24 = arith.constant dense<0.000000e+00> : vector<512xf32>
    %130 = vector.multi_reduction <add>, %129, %cst_24 [0] : vector<16x512xf32> to vector<512xf32>
    %131 = vector.shape_cast %130 : vector<512xf32> to vector<1x512xf32>
    %132 = arith.mulf %125, %125 : vector<1x512xf32>
    %133 = arith.subf %131, %132 : vector<1x512xf32>
    %134 = arith.mulf %125, %125 : vector<1x512xf32>
    %135 = arith.cmpf ogt, %133, %134 : vector<1x512xf32>
    %136 = arith.mulf %125, %125 : vector<1x512xf32>
    %137 = arith.subf %133, %136 : vector<1x512xf32>
    %138 = arith.select %135, %133, %137 : vector<1x512xi1>, vector<1x512xf32>
    %cst_25 = arith.constant 9.99999996E-13 : f32
    %139 = vector.broadcast %cst_25 : f32 to vector<1x512xf32>
    %140 = arith.maximumf %138, %139 : vector<1x512xf32>
    %141 = math.sqrt %140 : vector<1x512xf32>
    %cst_26 = arith.constant 1.000000e-07 : f32
    %142 = vector.broadcast %cst_26 : f32 to vector<1x512xf32>
    %143 = arith.maximumf %141, %142 : vector<1x512xf32>
    %144 = arith.divf %75, %143 : vector<1x512xf32>
    %cst_27 = arith.constant -5.000000e+00 : f32
    %cst_28 = arith.constant 5.000000e+00 : f32
    %145 = vector.broadcast %cst_27 : f32 to vector<1x512xf32>
    %146 = arith.maximumf %145, %144 : vector<1x512xf32>
    %147 = vector.broadcast %cst_28 : f32 to vector<1x512xf32>
    %148 = arith.minimumf %147, %146 : vector<1x512xf32>
    %149 = vector.broadcast %148 : vector<1x512xf32> to vector<16x512xf32>
    %150 = arith.mulf %149, %128 : vector<16x512xf32>
    %151 = arith.mulf %148, %125 : vector<1x512xf32>
    %152 = arith.mulf %84, %150 : vector<16x512xf32>
    %cst_29 = arith.constant dense<0.000000e+00> : vector<512xf32>
    %153 = vector.multi_reduction <add>, %152, %cst_29 [0] : vector<16x512xf32> to vector<512xf32>
    %154 = vector.shape_cast %153 : vector<512xf32> to vector<1x512xf32>
    %155 = arith.mulf %85, %151 : vector<1x512xf32>
    %156 = arith.subf %154, %155 : vector<1x512xf32>
    %157 = arith.andi %89, %135 : vector<1x512xi1>
    %158 = arith.mulf %85, %151 : vector<1x512xf32>
    %159 = arith.subf %156, %158 : vector<1x512xf32>
    %160 = arith.select %157, %156, %159 : vector<1x512xi1>, vector<1x512xf32>
    %161 = vector.broadcast %160 : vector<1x512xf32> to vector<16x512xf32>
    %162 = arith.mulf %161, %84 : vector<16x512xf32>
    %163 = arith.addf %150, %162 : vector<16x512xf32>
    %164 = vector.extract_strided_slice %163 {offsets = [0, 0], sizes = [1, 512], strides = [1, 1]} : vector<16x512xf32> to vector<1x512xf32>
    %165 = arith.mulf %163, %163 : vector<16x512xf32>
    %cst_30 = arith.constant dense<0.000000e+00> : vector<512xf32>
    %166 = vector.multi_reduction <add>, %165, %cst_30 [0] : vector<16x512xf32> to vector<512xf32>
    %167 = vector.shape_cast %166 : vector<512xf32> to vector<1x512xf32>
    %168 = arith.mulf %164, %164 : vector<1x512xf32>
    %169 = arith.subf %167, %168 : vector<1x512xf32>
    %cst_31 = arith.constant 0.000000e+00 : f32
    %170 = vector.broadcast %cst_31 : f32 to vector<1x512xf32>
    %171 = arith.maximumf %169, %170 : vector<1x512xf32>
    %172 = math.sqrt %171 : vector<1x512xf32>
    %cst_32 = arith.constant 1.000000e-07 : f32
    %173 = vector.broadcast %cst_32 : f32 to vector<1x512xf32>
    %174 = arith.maximumf %172, %173 : vector<1x512xf32>
    %cst_33 = arith.constant 1.000000e+00 : f32
    %175 = vector.broadcast %cst_33 : f32 to vector<1x512xf32>
    %176 = arith.divf %175, %174 : vector<1x512xf32>
    %177 = vector.broadcast %176 : vector<1x512xf32> to vector<16x512xf32>
    %178 = arith.mulf %163, %177 : vector<16x512xf32>
    %179 = arith.mulf %84, %178 : vector<16x512xf32>
    %cst_34 = arith.constant dense<0.000000e+00> : vector<512xf32>
    %180 = vector.multi_reduction <add>, %179, %cst_34 [0] : vector<16x512xf32> to vector<512xf32>
    %181 = vector.shape_cast %180 : vector<512xf32> to vector<1x512xf32>
    %182 = vector.extract_strided_slice %178 {offsets = [0, 0], sizes = [1, 512], strides = [1, 1]} : vector<16x512xf32> to vector<1x512xf32>
    %183 = arith.mulf %85, %182 : vector<1x512xf32>
    %184 = arith.subf %181, %183 : vector<1x512xf32>
    %185 = arith.mulf %184, %91 : vector<1x512xf32>
    %186 = vector.shape_cast %185 : vector<1x512xf32> to vector<1x512xf32>
    %187 = vector.broadcast %186 : vector<1x512xf32> to vector<16x512xf32>
    %188 = arith.select %4, %187, %178 : vector<16x512xi1>, vector<16x512xf32>
    %cst_35 = arith.constant 0.000000e+00 : f32
    %189 = vector.shape_cast %54 : vector<1x512xi1> to vector<1x512xi1>
    %190 = vector.broadcast %189 : vector<1x512xi1> to vector<16x512xi1>
    %191 = vector.broadcast %cst_35 : f32 to vector<16x512xf32>
    %192 = arith.select %190, %191, %188 : vector<16x512xi1>, vector<16x512xf32>
    %c0_36 = arith.constant 0 : index
    %c0_37 = arith.constant 0 : index
    %193 = vector.load %arg3[%c0_36, %c0_37] : memref<16x16xf32, #tpu.memory_space<vmem>>, vector<16x16xf32>
    %cst_38 = arith.constant dense<0.000000e+00> : vector<16x512xf32>
    %194 = tpu.matmul %193, %192, %cst_38 {dimension_numbers = #tpu.dot_dimension_numbers<[1], [0], [0], [1], [0, 0, 1, 1], [], []>} : vector<16x16xf32>, vector<16x512xf32>, vector<16x512xf32> -> vector<16x512xf32>
    %195 = arith.mulf %194, %192 : vector<16x512xf32>
    %cst_39 = arith.constant dense<0.000000e+00> : vector<512xf32>
    %196 = vector.multi_reduction <add>, %195, %cst_39 [0] : vector<16x512xf32> to vector<512xf32>
    %197 = vector.shape_cast %196 : vector<512xf32> to vector<1x512xf32>
    %198 = math.absf %197 : vector<1x512xf32>
    %199 = math.sqrt %198 : vector<1x512xf32>
    %c0_40 = arith.constant 0 : index
    %c0_41 = arith.constant 0 : index
    %200 = vector.load %arg4[%c0_40, %c0_41] : memref<1x512xf32, #tpu.memory_space<vmem>>, vector<1x512xf32>
    tpu.vector_store %arg4[%c0_40, %c0_41], %199 {strides = array<i32>} : memref<1x512xf32, #tpu.memory_space<vmem>>, vector<1x512xf32>,
    return
  }
  func.func @transform_0(%arg0: i32) -> (i32, i32) {
    %c0_i32 = arith.constant 0 : i32
    %c0_i32_0 = arith.constant 0 : i32
    return %c0_i32, %arg0 : i32, i32
  }
  func.func @transform_1(%arg0: i32) -> (i32, i32) {
    %c0_i32 = arith.constant 0 : i32
    %c0_i32_0 = arith.constant 0 : i32
    return %c0_i32, %arg0 : i32, i32
  }
  func.func @transform_2(%arg0: i32) -> (i32, i32) {
    %c0_i32 = arith.constant 0 : i32
    %c0_i32_0 = arith.constant 0 : i32
    %c0_i32_1 = arith.constant 0 : i32
    return %c0_i32, %c0_i32_0 : i32, i32
  }
  func.func @transform_3(%arg0: i32) -> (i32, i32) {
    %c0_i32 = arith.constant 0 : i32
    %c0_i32_0 = arith.constant 0 : i32
    return %c0_i32, %arg0 : i32, i32
  }
}

</mosaic_0001>

<llo_original>
// kernel: tpu_custom_call.1
$region0: #{tpu_custom_call.1}
  #allocation0 [shape = 'u32[]', space=smem, size = 0x4, offset = 0x4, fixed_abs, tag = 'smem constant byte address 0x4 - core index']
  #allocation1 [shape = 'u32[144,128]{1,0:T(1,128)}', space=vmem, size = 0x12000, scoped, tag = 'internal scratch']
  %s0 = inlined_call_operand.hbm [shape: f32[16,512], index: 0, kind: input, shape index: {}]
  %s1 = inlined_call_operand.hbm [shape: f32[16,512], index: 1, kind: input, shape index: {}]
  %s2 = inlined_call_operand.hbm [shape: f32[16,16], index: 2, kind: input, shape index: {}]
  %s3 = inlined_call_operand.hbm [shape: f32[1,512], index: 3, kind: output, shape index: {}]
  %s4 = sld [smem:[#allocation0]]
  $region34: #{tpu_custom_call.1} parent=0
    _
  %s6 = ssub.s32 1, %s4
  %s7 = scalar_select 0, %s6, %s4
  $region1: #{tpu_custom_call.1} parent=0
    #allocation2 [shape = 'u8[32768]{0}', space=vmem, size = 0x8000, scoped, tag = 'input window, operand 0, single buffered']
    #allocation3 [shape = 's32[1]{0}', space=sflag, size = 0x4, scoped, tag = 'scoped memory for tpu_custom_call.1']
    #allocation4 [shape = 's32[1]{0}', space=sflag, size = 0x4, scoped, tag = 'scoped memory for tpu_custom_call.1']
    #allocation5 [shape = 'u8[32768]{0}', space=vmem, size = 0x8000, scoped, tag = 'input window, operand 1, single buffered']
    #allocation6 [shape = 's32[1]{0}', space=sflag, size = 0x4, scoped, tag = 'scoped memory for tpu_custom_call.1']
    #allocation7 [shape = 'u8[8192]{0}', space=vmem, size = 0x2000, scoped, tag = 'input window, operand 2, single buffered']
    #allocation8 [shape = 'u8[2048]{0}', space=vmem, size = 0x800, scoped, tag = 'output window, operand 0, single buffered']
    %8 = vsyncpa [#allocation3], 0
    %9 = vsyncpa [#allocation6], 0
    %10 = vsyncpa [#allocation4], 0
    // Predicated region
    $region2: #{tpu_custom_call.1} parent=1 // pred_check
      _
    $region3: #{tpu_custom_call.1} parent=1 // pred_check_branch
      %12 = sbr.rel (0) target = $region5
    $region4: #{tpu_custom_call.1} parent=1 // pred_region
      %s14 = ssub.s32 1024, 1024
      %15 = vsyncadd [#allocation3], %s14
      %s16 = sshll.u32 [#allocation2], 4
      %s17 = int_to_ptr.vmem [resolvable:$true] %s16
      %22 = dma.hbm_to_vmem [thread:$0]  %s0, 1024, %s17, [#allocation3], 512, 512, 32
    $region5: #{tpu_custom_call.1} parent=1 // pred_fallthru
      _
    // Predicated region
    $region6: #{tpu_custom_call.1} parent=1 // pred_check
      _
    $region7: #{tpu_custom_call.1} parent=1 // pred_check_branch
      %24 = sbr.rel (0) target = $region9
    $region8: #{tpu_custom_call.1} parent=1 // pred_region
      %s26 = ssub.s32 1024, 1024
      %27 = vsyncadd [#allocation6], %s26
      %s28 = sshll.u32 [#allocation5], 4
      %s29 = int_to_ptr.vmem [resolvable:$true] %s28
      %34 = dma.hbm_to_vmem [thread:$0]  %s1, 1024, %s29, [#allocation6], 512, 512, 32
    $region9: #{tpu_custom_call.1} parent=1 // pred_fallthru
      _
    // Predicated region
    $region10: #{tpu_custom_call.1} parent=1 // pred_check
      _
    $region11: #{tpu_custom_call.1} parent=1 // pred_check_branch
      %36 = sbr.rel (0) target = $region13
    $region12: #{tpu_custom_call.1} parent=1 // pred_region
      %s38 = ssub.s32 256, 256
      %39 = vsyncadd [#allocation6], %s38
      %s40 = sshll.u32 [#allocation7], 4
      %s41 = int_to_ptr.vmem [resolvable:$true] %s40
      %46 = dma.hbm_to_vmem [thread:$0]  %s2, 256, %s41, [#allocation6], 128, 128, 8
    $region13: #{tpu_custom_call.1} parent=1 // pred_fallthru
      _
    // Predicated region
    $region14: #{tpu_custom_call.1} parent=1 // pred_check
      _
    $region15: #{tpu_custom_call.1} parent=1 // pred_check_branch
      %48 = sbr.rel (0) target = $region17
    $region16: #{tpu_custom_call.1} parent=1 // pred_region
      %49 = dma.done [#allocation3], 1024
    $region17: #{tpu_custom_call.1} parent=1 // pred_fallthru
      _
    // Predicated region
    $region18: #{tpu_custom_call.1} parent=1 // pred_check
      _
    $region19: #{tpu_custom_call.1} parent=1 // pred_check_branch
      %51 = sbr.rel (0) target = $region21
    $region20: #{tpu_custom_call.1} parent=1 // pred_region
      %52 = dma.done [#allocation6], 1024
    $region21: #{tpu_custom_call.1} parent=1 // pred_fallthru
      _
    // Predicated region
    $region22: #{tpu_custom_call.1} parent=1 // pred_check
      _
    $region23: #{tpu_custom_call.1} parent=1 // pred_check_branch
      %54 = sbr.rel (0) target = $region25
    $region24: #{tpu_custom_call.1} parent=1 // pred_region
      %55 = dma.done [#allocation6], 256
    $region25: #{tpu_custom_call.1} parent=1 // pred_fallthru
      _
    %v56 = vld [vmem:[#allocation2] sm:$0xff]
    %v57 = vld [vmem:[#allocation2 + $0x8] sm:$0xff]
    %v58 = vld [vmem:[#allocation2 + $0x10] sm:$0xff]
    %v59 = vld [vmem:[#allocation2 + $0x18] sm:$0xff]
    %v60 = vld [vmem:[#allocation2 + $0x20] sm:$0xff]
    %v61 = vld [vmem:[#allocation2 + $0x28] sm:$0xff]
    %v62 = vld [vmem:[#allocation2 + $0x30] sm:$0xff]
    %v63 = vld [vmem:[#allocation2 + $0x38] sm:$0xff]
    %v64 = vld [vmem:[#allocation5] sm:$0xff]
    %v65 = vld [vmem:[#allocation5 + $0x8] sm:$0xff]
    %v66 = vld [vmem:[#allocation5 + $0x10] sm:$0xff]
    %v67 = vld [vmem:[#allocation5 + $0x18] sm:$0xff]
    %v68 = vld [vmem:[#allocation5 + $0x20] sm:$0xff]
    %v69 = vld [vmem:[#allocation5 + $0x28] sm:$0xff]
    %v70 = vld [vmem:[#allocation5 + $0x30] sm:$0xff]
    %v71 = vld [vmem:[#allocation5 + $0x38] sm:$0xff]
    %v72 = vlaneseq
    %v73 = vshrl.u32 %v72, 7
    %v74 = vadd.s32 %v73, 8
    %vm75 = vcmp.eq.s32.totalorder %v73, 0
    %vm76 = vcmp.eq.s32.totalorder %v74, 0
    %v77 = vmul.f32 %v56, %v56
    %v78 = vmul.f32 %v57, %v57
    %v79 = vmul.f32 %v58, %v58
    %v80 = vmul.f32 %v59, %v59
    %v81 = vmul.f32 %v60, %v60
    %v82 = vmul.f32 %v61, %v61
    %v83 = vmul.f32 %v62, %v62
    %v84 = vmul.f32 %v63, %v63
    %v85 = vadd.f32 %v77, %v81
    %v86 = vrot.slane %v85, 4
    %v87 = vadd.f32 %v85, %v86
    %v88 = vrot.slane %v87, 2
    %v89 = vadd.f32 %v87, %v88
    %v90 = vrot.slane %v89, 1
    %v91 = vadd.f32 %v89, %v90
    %v92 = vadd.f32 %v78, %v82
    %v93 = vrot.slane %v92, 4
    %v94 = vadd.f32 %v92, %v93
    %v95 = vrot.slane %v94, 2
    %v96 = vadd.f32 %v94, %v95
    %v97 = vrot.slane %v96, 1
    %v98 = vadd.f32 %v96, %v97
    %v99 = vadd.f32 %v79, %v83
    %v100 = vrot.slane %v99, 4
    %v101 = vadd.f32 %v99, %v100
    %v102 = vrot.slane %v101, 2
    %v103 = vadd.f32 %v101, %v102
    %v104 = vrot.slane %v103, 1
    %v105 = vadd.f32 %v103, %v104
    %v106 = vadd.f32 %v80, %v84
    %v107 = vrot.slane %v106, 4
    %v108 = vadd.f32 %v106, %v107
    %v109 = vrot.slane %v108, 2
    %v110 = vadd.f32 %v108, %v109
    %v111 = vrot.slane %v110, 1
    %v112 = vadd.f32 %v110, %v111
    %v113 = vsub.f32 %v91, %v77
    %v114 = vsub.f32 %v98, %v78
    %v115 = vsub.f32 %v105, %v79
    %v116 = vsub.f32 %v112, %v80
    %v117 = vmul.f32 %v64, %v64
    %v118 = vmul.f32 %v65, %v65
    %v119 = vmul.f32 %v66, %v66
    %v120 = vmul.f32 %v67, %v67
    %v121 = vmul.f32 %v68, %v68
    %v122 = vmul.f32 %v69, %v69
    %v123 = vmul.f32 %v70, %v70
    %v124 = vmul.f32 %v71, %v71
    %v125 = vadd.f32 %v117, %v121
    %v126 = vrot.slane %v125, 4
    %v127 = vadd.f32 %v125, %v126
    %v128 = vrot.slane %v127, 2
    %v129 = vadd.f32 %v127, %v128
    %v130 = vrot.slane %v129, 1
    %v131 = vadd.f32 %v129, %v130
    %v132 = vadd.f32 %v118, %v122
    %v133 = vrot.slane %v132, 4
    %v134 = vadd.f32 %v132, %v133
    %v135 = vrot.slane %v134, 2
    %v136 = vadd.f32 %v134, %v135
    %v137 = vrot.slane %v136, 1
    %v138 = vadd.f32 %v136, %v137
    %v139 = vadd.f32 %v119, %v123
    %v140 = vrot.slane %v139, 4
    %v141 = vadd.f32 %v139, %v140
    %v142 = vrot.slane %v141, 2
    %v143 = vadd.f32 %v141, %v142
    %v144 = vrot.slane %v143, 1
    %v145 = vadd.f32 %v143, %v144
    %v146 = vadd.f32 %v120, %v124
    %v147 = vrot.slane %v146, 4
    %v148 = vadd.f32 %v146, %v147
    %v149 = vrot.slane %v148, 2
    %v150 = vadd.f32 %v148, %v149
    %v151 = vrot.slane %v150, 1
    %v152 = vadd.f32 %v150, %v151
    %v153 = vsub.f32 %v131, %v117
    %v154 = vsub.f32 %v138, %v118
    %v155 = vsub.f32 %v145, %v119
    %v156 = vsub.f32 %v152, %v120
    %vm157 = vcmp.gt.f32.partialorder %v113, %v77
    %vm158 = vcmp.gt.f32.partialorder %v114, %v78
    %vm159 = vcmp.gt.f32.partialorder %v115, %v79
    %vm160 = vcmp.gt.f32.partialorder %v116, %v80
    %v161 = vrsqrt.pop %v113
    %v162 = vmul.f32 %v113, %v161
    %vm163 = vcmp.eq.f32.partialorder %v113, inf
    %v164 = vsel %vm163, %v113, %v162
    %vm165 = vcmp.eq.f32.partialorder %v113, 0.0
    %v166 = vand.u32 %v113, 2147483648
    %v167 = vsel %vm165, %v166, %v164
    %v168 = vrsqrt.pop %v114
    %v169 = vmul.f32 %v114, %v168
    %vm170 = vcmp.eq.f32.partialorder %v114, inf
    %v171 = vsel %vm170, %v114, %v169
    %vm172 = vcmp.eq.f32.partialorder %v114, 0.0
    %v173 = vand.u32 %v114, 2147483648
    %v174 = vsel %vm172, %v173, %v171
    %v175 = vrsqrt.pop %v115
    %v176 = vmul.f32 %v115, %v175
    %vm177 = vcmp.eq.f32.partialorder %v115, inf
    %v178 = vsel %vm177, %v115, %v176
    %vm179 = vcmp.eq.f32.partialorder %v115, 0.0
    %v180 = vand.u32 %v115, 2147483648
    %v181 = vsel %vm179, %v180, %v178
    %v182 = vrsqrt.pop %v116
    %v183 = vmul.f32 %v116, %v182
    %vm184 = vcmp.eq.f32.partialorder %v116, inf
    %v185 = vsel %vm184, %v116, %v183
    %vm186 = vcmp.eq.f32.partialorder %v116, 0.0
    %v187 = vand.u32 %v116, 2147483648
    %v188 = vsel %vm186, %v187, %v185
    %v189 = vmul.f32 %v167, 0.9
    %v190 = vmul.f32 %v174, 0.9
    %v191 = vmul.f32 %v181, 0.9
    %v192 = vmul.f32 %v188, 0.9
    %v193 = vadd.f32 %v113, 1.0
    %v194 = vadd.f32 %v114, 1.0
    %v195 = vadd.f32 %v115, 1.0
    %v196 = vadd.f32 %v116, 1.0
    %v197 = vrsqrt.pop %v193
    %v198 = vmul.f32 %v193, %v197
    %vm199 = vcmp.eq.f32.partialorder %v193, inf
    %v200 = vsel %vm199, %v193, %v198
    %vm201 = vcmp.eq.f32.partialorder %v193, 0.0
    %v202 = vand.u32 %v193, 2147483648
    %v203 = vsel %vm201, %v202, %v200
    %v204 = vrsqrt.pop %v194
    %v205 = vmul.f32 %v194, %v204
    %vm206 = vcmp.eq.f32.partialorder %v194, inf
    %v207 = vsel %vm206, %v194, %v205
    %vm208 = vcmp.eq.f32.partialorder %v194, 0.0
    %v209 = vand.u32 %v194, 2147483648
    %v210 = vsel %vm208, %v209, %v207
    %v211 = vrsqrt.pop %v195
    %v212 = vmul.f32 %v195, %v211
    %vm213 = vcmp.eq.f32.partialorder %v195, inf
    %v214 = vsel %vm213, %v195, %v212
    %vm215 = vcmp.eq.f32.partialorder %v195, 0.0
    %v216 = vand.u32 %v195, 2147483648
    %v217 = vsel %vm215, %v216, %v214
    %v218 = vrsqrt.pop %v196
    %v219 = vmul.f32 %v196, %v218
    %vm220 = vcmp.eq.f32.partialorder %v196, inf
    %v221 = vsel %vm220, %v196, %v219
    %vm222 = vcmp.eq.f32.partialorder %v196, 0.0
    %v223 = vand.u32 %v196, 2147483648
    %v224 = vsel %vm222, %v223, %v221
    %v225 = vsel %vm157, %v189, %v203
    %v226 = vsel %vm158, %v190, %v210
    %v227 = vsel %vm159, %v191, %v217
    %v228 = vsel %vm160, %v192, %v224
    %v229 = vlaneseq
    %v230 = vshrl.u32 %v229, 7
    %v231 = vsub.s32 0, %v230
    %v232 = vrot.slane %v225, %v231
    %v233 = vlaneseq
    %v234 = vshrl.u32 %v233, 7
    %v235 = vsub.s32 0, %v234
    %v236 = vrot.slane %v226, %v235
    %v237 = vlaneseq
    %v238 = vshrl.u32 %v237, 7
    %v239 = vsub.s32 0, %v238
    %v240 = vrot.slane %v227, %v239
    %v241 = vlaneseq
    %v242 = vshrl.u32 %v241, 7
    %v243 = vsub.s32 0, %v242
    %v244 = vrot.slane %v228, %v243
    %v245 = vsel %vm75, %v232, %v56
    %v246 = vsel %vm75, %v236, %v57
    %v247 = vsel %vm75, %v240, %v58
    %v248 = vsel %vm75, %v244, %v59
    %v249 = vsel %vm76, %v232, %v60
    %v250 = vsel %vm76, %v236, %v61
    %v251 = vsel %vm76, %v240, %v62
    %v252 = vsel %vm76, %v244, %v63
    %vm253 = vcmp.gt.f32.partialorder %v153, %v117
    %vm254 = vcmp.gt.f32.partialorder %v154, %v118
    %vm255 = vcmp.gt.f32.partialorder %v155, %v119
    %vm256 = vcmp.gt.f32.partialorder %v156, %v120
    %v257 = vrsqrt.pop %v153
    %v258 = vmul.f32 %v153, %v257
    %vm259 = vcmp.eq.f32.partialorder %v153, inf
    %v260 = vsel %vm259, %v153, %v258
    %vm261 = vcmp.eq.f32.partialorder %v153, 0.0
    %v262 = vand.u32 %v153, 2147483648
    %v263 = vsel %vm261, %v262, %v260
    %v264 = vrsqrt.pop %v154
    %v265 = vmul.f32 %v154, %v264
    %vm266 = vcmp.eq.f32.partialorder %v154, inf
    %v267 = vsel %vm266, %v154, %v265
    %vm268 = vcmp.eq.f32.partialorder %v154, 0.0
    %v269 = vand.u32 %v154, 2147483648
    %v270 = vsel %vm268, %v269, %v267
    %v271 = vrsqrt.pop %v155
    %v272 = vmul.f32 %v155, %v271
    %vm273 = vcmp.eq.f32.partialorder %v155, inf
    %v274 = vsel %vm273, %v155, %v272
    %vm275 = vcmp.eq.f32.partialorder %v155, 0.0
    %v276 = vand.u32 %v155, 2147483648
    %v277 = vsel %vm275, %v276, %v274
    %v278 = vrsqrt.pop %v156
    %v279 = vmul.f32 %v156, %v278
    %vm280 = vcmp.eq.f32.partialorder %v156, inf
    %v281 = vsel %vm280, %v156, %v279
    %vm282 = vcmp.eq.f32.partialorder %v156, 0.0
    %v283 = vand.u32 %v156, 2147483648
    %v284 = vsel %vm282, %v283, %v281
    %v285 = vmul.f32 %v263, 0.9
    %v286 = vmul.f32 %v270, 0.9
    %v287 = vmul.f32 %v277, 0.9
    %v288 = vmul.f32 %v284, 0.9
    %v289 = vadd.f32 %v153, 1.0
    %v290 = vadd.f32 %v154, 1.0
    %v291 = vadd.f32 %v155, 1.0
    %v292 = vadd.f32 %v156, 1.0
    %v293 = vrsqrt.pop %v289
    %v294 = vmul.f32 %v289, %v293
    %vm295 = vcmp.eq.f32.partialorder %v289, inf
    %v296 = vsel %vm295, %v289, %v294
    %vm297 = vcmp.eq.f32.partialorder %v289, 0.0
    %v298 = vand.u32 %v289, 2147483648
    %v299 = vsel %vm297, %v298, %v296
    %v300 = vrsqrt.pop %v290
    %v301 = vmul.f32 %v290, %v300
    %vm302 = vcmp.eq.f32.partialorder %v290, inf
    %v303 = vsel %vm302, %v290, %v301
    %vm304 = vcmp.eq.f32.partialorder %v290, 0.0
    %v305 = vand.u32 %v290, 2147483648
    %v306 = vsel %vm304, %v305, %v303
    %v307 = vrsqrt.pop %v291
    %v308 = vmul.f32 %v291, %v307
    %vm309 = vcmp.eq.f32.partialorder %v291, inf
    %v310 = vsel %vm309, %v291, %v308
    %vm311 = vcmp.eq.f32.partialorder %v291, 0.0
    %v312 = vand.u32 %v291, 2147483648
    %v313 = vsel %vm311, %v312, %v310
    %v314 = vrsqrt.pop %v292
    %v315 = vmul.f32 %v292, %v314
    %vm316 = vcmp.eq.f32.partialorder %v292, inf
    %v317 = vsel %vm316, %v292, %v315
    %vm318 = vcmp.eq.f32.partialorder %v292, 0.0
    %v319 = vand.u32 %v292, 2147483648
    %v320 = vsel %vm318, %v319, %v317
    %v321 = vsel %vm253, %v285, %v299
    %v322 = vsel %vm254, %v286, %v306
    %v323 = vsel %vm255, %v287, %v313
    %v324 = vsel %vm256, %v288, %v320
    %v325 = vlaneseq
    %v326 = vshrl.u32 %v325, 7
    %v327 = vsub.s32 0, %v326
    %v328 = vrot.slane %v321, %v327
    %v329 = vlaneseq
    %v330 = vshrl.u32 %v329, 7
    %v331 = vsub.s32 0, %v330
    %v332 = vrot.slane %v322, %v331
    %v333 = vlaneseq
    %v334 = vshrl.u32 %v333, 7
    %v335 = vsub.s32 0, %v334
    %v336 = vrot.slane %v323, %v335
    %v337 = vlaneseq
    %v338 = vshrl.u32 %v337, 7
    %v339 = vsub.s32 0, %v338
    %v340 = vrot.slane %v324, %v339
    %v341 = vsel %vm75, %v328, %v64
    %v342 = vsel %vm75, %v332, %v65
    %v343 = vsel %vm75, %v336, %v66
    %v344 = vsel %vm75, %v340, %v67
    %v345 = vsel %vm76, %v328, %v68
    %v346 = vsel %vm76, %v332, %v69
    %v347 = vsel %vm76, %v336, %v70
    %v348 = vsel %vm76, %v340, %v71
    %v349 = vmul.f32 %v225, %v225
    %v350 = vmul.f32 %v226, %v226
    %v351 = vmul.f32 %v227, %v227
    %v352 = vmul.f32 %v228, %v228
    %vm353 = vcmp.gt.f32.partialorder %v113, %v349
    %vm354 = vcmp.gt.f32.partialorder %v114, %v350
    %vm355 = vcmp.gt.f32.partialorder %v115, %v351
    %vm356 = vcmp.gt.f32.partialorder %v116, %v352
    %v357 = vmul.f32 %v321, %v321
    %v358 = vmul.f32 %v322, %v322
    %v359 = vmul.f32 %v323, %v323
    %v360 = vmul.f32 %v324, %v324
    %vm361 = vcmp.gt.f32.partialorder %v153, %v357
    %vm362 = vcmp.gt.f32.partialorder %v154, %v358
    %vm363 = vcmp.gt.f32.partialorder %v155, %v359
    %vm364 = vcmp.gt.f32.partialorder %v156, %v360
    %v365 = vsub.f32 %v245, %v341
    %v366 = vsub.f32 %v246, %v342
    %v367 = vsub.f32 %v247, %v343
    %v368 = vsub.f32 %v248, %v344
    %v369 = vsub.f32 %v249, %v345
    %v370 = vsub.f32 %v250, %v346
    %v371 = vsub.f32 %v251, %v347
    %v372 = vsub.f32 %v252, %v348
    %v373 = vand.u32 2147483647, %v365
    %v374 = vand.u32 2147483647, %v366
    %v375 = vand.u32 2147483647, %v367
    %v376 = vand.u32 2147483647, %v368
    %v377 = vand.u32 2147483647, %v369
    %v378 = vand.u32 2147483647, %v370
    %v379 = vand.u32 2147483647, %v371
    %v380 = vand.u32 2147483647, %v372
    %v381 = vand.u32 2147483647, %v341
    %v382 = vand.u32 2147483647, %v342
    %v383 = vand.u32 2147483647, %v343
    %v384 = vand.u32 2147483647, %v344
    %v385 = vand.u32 2147483647, %v345
    %v386 = vand.u32 2147483647, %v346
    %v387 = vand.u32 2147483647, %v347
    %v388 = vand.u32 2147483647, %v348
    %v389 = vmul.f32 %v381, 1e-05
    %v390 = vmul.f32 %v382, 1e-05
    %v391 = vmul.f32 %v383, 1e-05
    %v392 = vmul.f32 %v384, 1e-05
    %v393 = vmul.f32 %v385, 1e-05
    %v394 = vmul.f32 %v386, 1e-05
    %v395 = vmul.f32 %v387, 1e-05
    %v396 = vmul.f32 %v388, 1e-05
    %v397 = vsub.f32 %v373, %v389
    %v398 = vsub.f32 %v374, %v390
    %v399 = vsub.f32 %v375, %v391
    %v400 = vsub.f32 %v376, %v392
    %v401 = vsub.f32 %v377, %v393
    %v402 = vsub.f32 %v378, %v394
    %v403 = vsub.f32 %v379, %v395
    %v404 = vsub.f32 %v380, %v396
    %v405 = vmax.f32 %v397, %v401
    %v406 = vrot.slane %v405, 4
    %v407 = vmax.f32 %v405, %v406
    %v408 = vrot.slane %v407, 2
    %v409 = vmax.f32 %v407, %v408
    %v410 = vrot.slane %v409, 1
    %v411 = vmax.f32 %v409, %v410
    %v412 = vmax.f32 %v398, %v402
    %v413 = vrot.slane %v412, 4
    %v414 = vmax.f32 %v412, %v413
    %v415 = vrot.slane %v414, 2
    %v416 = vmax.f32 %v414, %v415
    %v417 = vrot.slane %v416, 1
    %v418 = vmax.f32 %v416, %v417
    %v419 = vmax.f32 %v399, %v403
    %v420 = vrot.slane %v419, 4
    %v421 = vmax.f32 %v419, %v420
    %v422 = vrot.slane %v421, 2
    %v423 = vmax.f32 %v421, %v422
    %v424 = vrot.slane %v423, 1
    %v425 = vmax.f32 %v423, %v424
    %v426 = vmax.f32 %v400, %v404
    %v427 = vrot.slane %v426, 4
    %v428 = vmax.f32 %v426, %v427
    %v429 = vrot.slane %v428, 2
    %v430 = vmax.f32 %v428, %v429
    %v431 = vrot.slane %v430, 1
    %v432 = vmax.f32 %v430, %v431
    %vm433 = vcmp.le.f32.partialorder %v411, 1e-07
    %vm434 = vcmp.le.f32.partialorder %v418, 1e-07
    %vm435 = vcmp.le.f32.partialorder %v425, 1e-07
    %vm436 = vcmp.le.f32.partialorder %v432, 1e-07
    %v437 = vmul.f32 %v245, %v341
    %v438 = vmul.f32 %v246, %v342
    %v439 = vmul.f32 %v247, %v343
    %v440 = vmul.f32 %v248, %v344
    %v441 = vmul.f32 %v249, %v345
    %v442 = vmul.f32 %v250, %v346
    %v443 = vmul.f32 %v251, %v347
    %v444 = vmul.f32 %v252, %v348
    %v445 = vadd.f32 %v437, %v441
    %v446 = vrot.slane %v445, 4
    %v447 = vadd.f32 %v445, %v446
    %v448 = vrot.slane %v447, 2
    %v449 = vadd.f32 %v447, %v448
    %v450 = vrot.slane %v449, 1
    %v451 = vadd.f32 %v449, %v450
    %v452 = vadd.f32 %v438, %v442
    %v453 = vrot.slane %v452, 4
    %v454 = vadd.f32 %v452, %v453
    %v455 = vrot.slane %v454, 2
    %v456 = vadd.f32 %v454, %v455
    %v457 = vrot.slane %v456, 1
    %v458 = vadd.f32 %v456, %v457
    %v459 = vadd.f32 %v439, %v443
    %v460 = vrot.slane %v459, 4
    %v461 = vadd.f32 %v459, %v460
    %v462 = vrot.slane %v461, 2
    %v463 = vadd.f32 %v461, %v462
    %v464 = vrot.slane %v463, 1
    %v465 = vadd.f32 %v463, %v464
    %v466 = vadd.f32 %v440, %v444
    %v467 = vrot.slane %v466, 4
    %v468 = vadd.f32 %v466, %v467
    %v469 = vrot.slane %v468, 2
    %v470 = vadd.f32 %v468, %v469
    %v471 = vrot.slane %v470, 1
    %v472 = vadd.f32 %v470, %v471
    %v473 = vmul.f32 %v225, %v321
    %v474 = vmul.f32 %v226, %v322
    %v475 = vmul.f32 %v227, %v323
    %v476 = vmul.f32 %v228, %v324
    %v477 = vsub.f32 %v451, %v473
    %v478 = vsub.f32 %v458, %v474
    %v479 = vsub.f32 %v465, %v475
    %v480 = vsub.f32 %v472, %v476
    %vm481 = vmand %vm353, %vm361
    %vm482 = vmand %vm354, %vm362
    %vm483 = vmand %vm355, %vm363
    %vm484 = vmand %vm356, %vm364
    %v485 = vsub.f32 %v477, %v473
    %v486 = vsub.f32 %v478, %v474
    %v487 = vsub.f32 %v479, %v475
    %v488 = vsub.f32 %v480, %v476
    %v489 = vsel %vm481, %v477, %v485
    %v490 = vsel %vm482, %v478, %v486
    %v491 = vsel %vm483, %v479, %v487
    %v492 = vsel %vm484, %v480, %v488
    %v493 = vsub.f32 0.0, %v489
    %v494 = vsub.f32 0.0, %v490
    %v495 = vsub.f32 0.0, %v491
    %v496 = vsub.f32 0.0, %v492
    %v497 = vmax.f32 %v493, 1.0000001
    %v498 = vmax.f32 %v494, 1.0000001
    %v499 = vmax.f32 %v495, 1.0000001
    %v500 = vmax.f32 %v496, 1.0000001
    %v501 = vmin.f32 %v497, 5.0
    %v502 = vmin.f32 %v498, 5.0
    %v503 = vmin.f32 %v499, 5.0
    %v504 = vmin.f32 %v500, 5.0
    %v505 = vmul.f32 %v501, %v501
    %v506 = vmul.f32 %v502, %v502
    %v507 = vmul.f32 %v503, %v503
    %v508 = vmul.f32 %v504, %v504
    %v509 = vsub.f32 %v505, 1.0
    %v510 = vsub.f32 %v506, 1.0
    %v511 = vsub.f32 %v507, 1.0
    %v512 = vsub.f32 %v508, 1.0
    %v513 = vrsqrt.pop %v509
    %v514 = vmul.f32 %v509, %v513
    %vm515 = vcmp.eq.f32.partialorder %v509, inf
    %v516 = vsel %vm515, %v509, %v514
    %vm517 = vcmp.eq.f32.partialorder %v509, 0.0
    %v518 = vand.u32 %v509, 2147483648
    %v519 = vsel %vm517, %v518, %v516
    %v520 = vrsqrt.pop %v510
    %v521 = vmul.f32 %v510, %v520
    %vm522 = vcmp.eq.f32.partialorder %v510, inf
    %v523 = vsel %vm522, %v510, %v521
    %vm524 = vcmp.eq.f32.partialorder %v510, 0.0
    %v525 = vand.u32 %v510, 2147483648
    %v526 = vsel %vm524, %v525, %v523
    %v527 = vrsqrt.pop %v511
    %v528 = vmul.f32 %v511, %v527
    %vm529 = vcmp.eq.f32.partialorder %v511, inf
    %v530 = vsel %vm529, %v511, %v528
    %vm531 = vcmp.eq.f32.partialorder %v511, 0.0
    %v532 = vand.u32 %v511, 2147483648
    %v533 = vsel %vm531, %v532, %v530
    %v534 = vrsqrt.pop %v512
    %v535 = vmul.f32 %v512, %v534
    %vm536 = vcmp.eq.f32.partialorder %v512, inf
    %v537 = vsel %vm536, %v512, %v535
    %vm538 = vcmp.eq.f32.partialorder %v512, 0.0
    %v539 = vand.u32 %v512, 2147483648
    %v540 = vsel %vm538, %v539, %v537
    %v541 = vadd.f32 %v501, %v519
    %v542 = vadd.f32 %v502, %v526
    %v543 = vadd.f32 %v503, %v533
    %v544 = vadd.f32 %v504, %v540
    %v545 = vlog2.pop %v541
    %v546 = vmul.f32 %v545, 0.6931472
    %v547 = vlog2.pop %v542
    %v548 = vmul.f32 %v547, 0.6931472
    %v549 = vlog2.pop %v543
    %v550 = vmul.f32 %v549, 0.6931472
    %v551 = vlog2.pop %v544
    %v552 = vmul.f32 %v551, 0.6931472
    %v553 = vsub.f32 %v113, %v349
    %v554 = vsub.f32 %v114, %v350
    %v555 = vsub.f32 %v115, %v351
    %v556 = vsub.f32 %v116, %v352
    %v557 = vsel %vm353, %v113, %v553
    %v558 = vsel %vm354, %v114, %v554
    %v559 = vsel %vm355, %v115, %v555
    %v560 = vsel %vm356, %v116, %v556
    %v561 = vand.u32 2147483647, %v557
    %v562 = vand.u32 2147483647, %v558
    %v563 = vand.u32 2147483647, %v559
    %v564 = vand.u32 2147483647, %v560
    %v565 = vrsqrt.pop %v561
    %v566 = vmul.f32 %v561, %v565
    %vm567 = vcmp.eq.f32.partialorder %v561, inf
    %v568 = vsel %vm567, %v561, %v566
    %vm569 = vcmp.eq.f32.partialorder %v561, 0.0
    %v570 = vand.u32 %v561, 2147483648
    %v571 = vsel %vm569, %v570, %v568
    %v572 = vrsqrt.pop %v562
    %v573 = vmul.f32 %v562, %v572
    %vm574 = vcmp.eq.f32.partialorder %v562, inf
    %v575 = vsel %vm574, %v562, %v573
    %vm576 = vcmp.eq.f32.partialorder %v562, 0.0
    %v577 = vand.u32 %v562, 2147483648
    %v578 = vsel %vm576, %v577, %v575
    %v579 = vrsqrt.pop %v563
    %v580 = vmul.f32 %v563, %v579
    %vm581 = vcmp.eq.f32.partialorder %v563, inf
    %v582 = vsel %vm581, %v563, %v580
    %vm583 = vcmp.eq.f32.partialorder %v563, 0.0
    %v584 = vand.u32 %v563, 2147483648
    %v585 = vsel %vm583, %v584, %v582
    %v586 = vrsqrt.pop %v564
    %v587 = vmul.f32 %v564, %v586
    %vm588 = vcmp.eq.f32.partialorder %v564, inf
    %v589 = vsel %vm588, %v564, %v587
    %vm590 = vcmp.eq.f32.partialorder %v564, 0.0
    %v591 = vand.u32 %v564, 2147483648
    %v592 = vsel %vm590, %v591, %v589
    %v593 = vrcp.pop %v571
    %v594 = vmul.f32 1.0, %v593
    %v595 = vrcp.pop %v578
    %v596 = vmul.f32 1.0, %v595
    %v597 = vrcp.pop %v585
    %v598 = vmul.f32 1.0, %v597
    %v599 = vrcp.pop %v592
    %v600 = vmul.f32 1.0, %v599
    %v601 = vlaneseq
    %v602 = vshrl.u32 %v601, 7
    %v603 = vsub.s32 0, %v602
    %v604 = vrot.slane %v594, %v603
    %v605 = vlaneseq
    %v606 = vshrl.u32 %v605, 7
    %v607 = vsub.s32 0, %v606
    %v608 = vrot.slane %v596, %v607
    %v609 = vlaneseq
    %v610 = vshrl.u32 %v609, 7
    %v611 = vsub.s32 0, %v610
    %v612 = vrot.slane %v598, %v611
    %v613 = vlaneseq
    %v614 = vshrl.u32 %v613, 7
    %v615 = vsub.s32 0, %v614
    %v616 = vrot.slane %v600, %v615
    %v617 = vmul.f32 %v245, %v604
    %v618 = vmul.f32 %v246, %v608
    %v619 = vmul.f32 %v247, %v612
    %v620 = vmul.f32 %v248, %v616
    %v621 = vmul.f32 %v249, %v604
    %v622 = vmul.f32 %v250, %v608
    %v623 = vmul.f32 %v251, %v612
    %v624 = vmul.f32 %v252, %v616
    %v625 = vmul.f32 %v225, %v594
    %v626 = vmul.f32 %v226, %v596
    %v627 = vmul.f32 %v227, %v598
    %v628 = vmul.f32 %v228, %v600
    %v629 = vmul.f32 %v113, %v594
    %v630 = vmul.f32 %v114, %v596
    %v631 = vmul.f32 %v115, %v598
    %v632 = vmul.f32 %v116, %v600
    %v633 = vmul.f32 %v629, %v594
    %v634 = vmul.f32 %v630, %v596
    %v635 = vmul.f32 %v631, %v598
    %v636 = vmul.f32 %v632, %v600
    %v637 = vmul.f32 %v625, %v625
    %v638 = vmul.f32 %v626, %v626
    %v639 = vmul.f32 %v627, %v627
    %v640 = vmul.f32 %v628, %v628
    %vm641 = vcmp.gt.f32.partialorder %v633, %v637
    %vm642 = vcmp.gt.f32.partialorder %v634, %v638
    %vm643 = vcmp.gt.f32.partialorder %v635, %v639
    %vm644 = vcmp.gt.f32.partialorder %v636, %v640
    %v645 = vrcp.pop %v625
    %v646 = vmul.f32 1.0, %v645
    %v647 = vrcp.pop %v626
    %v648 = vmul.f32 1.0, %v647
    %v649 = vrcp.pop %v627
    %v650 = vmul.f32 1.0, %v649
    %v651 = vrcp.pop %v628
    %v652 = vmul.f32 1.0, %v651
    %v653 = vmul.f32 %v617, %v341
    %v654 = vmul.f32 %v618, %v342
    %v655 = vmul.f32 %v619, %v343
    %v656 = vmul.f32 %v620, %v344
    %v657 = vmul.f32 %v621, %v345
    %v658 = vmul.f32 %v622, %v346
    %v659 = vmul.f32 %v623, %v347
    %v660 = vmul.f32 %v624, %v348
    %v661 = vadd.f32 %v653, %v657
    %v662 = vrot.slane %v661, 4
    %v663 = vadd.f32 %v661, %v662
    %v664 = vrot.slane %v663, 2
    %v665 = vadd.f32 %v663, %v664
    %v666 = vrot.slane %v665, 1
    %v667 = vadd.f32 %v665, %v666
    %v668 = vadd.f32 %v654, %v658
    %v669 = vrot.slane %v668, 4
    %v670 = vadd.f32 %v668, %v669
    %v671 = vrot.slane %v670, 2
    %v672 = vadd.f32 %v670, %v671
    %v673 = vrot.slane %v672, 1
    %v674 = vadd.f32 %v672, %v673
    %v675 = vadd.f32 %v655, %v659
    %v676 = vrot.slane %v675, 4
    %v677 = vadd.f32 %v675, %v676
    %v678 = vrot.slane %v677, 2
    %v679 = vadd.f32 %v677, %v678
    %v680 = vrot.slane %v679, 1
    %v681 = vadd.f32 %v679, %v680
    %v682 = vadd.f32 %v656, %v660
    %v683 = vrot.slane %v682, 4
    %v684 = vadd.f32 %v682, %v683
    %v685 = vrot.slane %v684, 2
    %v686 = vadd.f32 %v684, %v685
    %v687 = vrot.slane %v686, 1
    %v688 = vadd.f32 %v686, %v687
    %v689 = vmul.f32 %v625, %v321
    %v690 = vmul.f32 %v626, %v322
    %v691 = vmul.f32 %v627, %v323
    %v692 = vmul.f32 %v628, %v324
    %v693 = vsub.f32 %v667, %v689
    %v694 = vsub.f32 %v674, %v690
    %v695 = vsub.f32 %v681, %v691
    %v696 = vsub.f32 %v688, %v692
    %vm697 = vmand %vm641, %vm361
    %vm698 = vmand %vm642, %vm362
    %vm699 = vmand %vm643, %vm363
    %vm700 = vmand %vm644, %vm364
    %v701 = vsub.f32 %v693, %v689
    %v702 = vsub.f32 %v694, %v690
    %v703 = vsub.f32 %v695, %v691
    %v704 = vsub.f32 %v696, %v692
    %v705 = vsel %vm697, %v693, %v701
    %v706 = vsel %vm698, %v694, %v702
    %v707 = vsel %vm699, %v695, %v703
    %v708 = vsel %vm700, %v696, %v704
    %v709 = vlaneseq
    %v710 = vshrl.u32 %v709, 7
    %v711 = vsub.s32 0, %v710
    %v712 = vrot.slane %v705, %v711
    %v713 = vlaneseq
    %v714 = vshrl.u32 %v713, 7
    %v715 = vsub.s32 0, %v714
    %v716 = vrot.slane %v706, %v715
    %v717 = vlaneseq
    %v718 = vshrl.u32 %v717, 7
    %v719 = vsub.s32 0, %v718
    %v720 = vrot.slane %v707, %v719
    %v721 = vlaneseq
    %v722 = vshrl.u32 %v721, 7
    %v723 = vsub.s32 0, %v722
    %v724 = vrot.slane %v708, %v723
    %v725 = vmul.f32 %v712, %v617
    %v726 = vmul.f32 %v716, %v618
    %v727 = vmul.f32 %v720, %v619
    %v728 = vmul.f32 %v724, %v620
    %v729 = vmul.f32 %v712, %v621
    %v730 = vmul.f32 %v716, %v622
    %v731 = vmul.f32 %v720, %v623
    %v732 = vmul.f32 %v724, %v624
    %v733 = vadd.f32 %v341, %v725
    %v734 = vadd.f32 %v342, %v726
    %v735 = vadd.f32 %v343, %v727
    %v736 = vadd.f32 %v344, %v728
    %v737 = vadd.f32 %v345, %v729
    %v738 = vadd.f32 %v346, %v730
    %v739 = vadd.f32 %v347, %v731
    %v740 = vadd.f32 %v348, %v732
    %v741 = vmul.f32 %v733, %v733
    %v742 = vmul.f32 %v734, %v734
    %v743 = vmul.f32 %v735, %v735
    %v744 = vmul.f32 %v736, %v736
    %v745 = vmul.f32 %v737, %v737
    %v746 = vmul.f32 %v738, %v738
    %v747 = vmul.f32 %v739, %v739
    %v748 = vmul.f32 %v740, %v740
    %v749 = vadd.f32 %v741, %v745
    %v750 = vrot.slane %v749, 4
    %v751 = vadd.f32 %v749, %v750
    %v752 = vrot.slane %v751, 2
    %v753 = vadd.f32 %v751, %v752
    %v754 = vrot.slane %v753, 1
    %v755 = vadd.f32 %v753, %v754
    %v756 = vadd.f32 %v742, %v746
    %v757 = vrot.slane %v756, 4
    %v758 = vadd.f32 %v756, %v757
    %v759 = vrot.slane %v758, 2
    %v760 = vadd.f32 %v758, %v759
    %v761 = vrot.slane %v760, 1
    %v762 = vadd.f32 %v760, %v761
    %v763 = vadd.f32 %v743, %v747
    %v764 = vrot.slane %v763, 4
    %v765 = vadd.f32 %v763, %v764
    %v766 = vrot.slane %v765, 2
    %v767 = vadd.f32 %v765, %v766
    %v768 = vrot.slane %v767, 1
    %v769 = vadd.f32 %v767, %v768
    %v770 = vadd.f32 %v744, %v748
    %v771 = vrot.slane %v770, 4
    %v772 = vadd.f32 %v770, %v771
    %v773 = vrot.slane %v772, 2
    %v774 = vadd.f32 %v772, %v773
    %v775 = vrot.slane %v774, 1
    %v776 = vadd.f32 %v774, %v775
    %v777 = vsub.f32 %v755, %v741
    %v778 = vsub.f32 %v762, %v742
    %v779 = vsub.f32 %v769, %v743
    %v780 = vsub.f32 %v776, %v744
    %v781 = vmax.f32 %v777, 0.0
    %v782 = vmax.f32 %v778, 0.0
    %v783 = vmax.f32 %v779, 0.0
    %v784 = vmax.f32 %v780, 0.0
    %v785 = vrsqrt.pop %v781
    %v786 = vmul.f32 %v781, %v785
    %vm787 = vcmp.eq.f32.partialorder %v781, inf
    %v788 = vsel %vm787, %v781, %v786
    %vm789 = vcmp.eq.f32.partialorder %v781, 0.0
    %v790 = vand.u32 %v781, 2147483648
    %v791 = vsel %vm789, %v790, %v788
    %v792 = vrsqrt.pop %v782
    %v793 = vmul.f32 %v782, %v792
    %vm794 = vcmp.eq.f32.partialorder %v782, inf
    %v795 = vsel %vm794, %v782, %v793
    %vm796 = vcmp.eq.f32.partialorder %v782, 0.0
    %v797 = vand.u32 %v782, 2147483648
    %v798 = vsel %vm796, %v797, %v795
    %v799 = vrsqrt.pop %v783
    %v800 = vmul.f32 %v783, %v799
    %vm801 = vcmp.eq.f32.partialorder %v783, inf
    %v802 = vsel %vm801, %v783, %v800
    %vm803 = vcmp.eq.f32.partialorder %v783, 0.0
    %v804 = vand.u32 %v783, 2147483648
    %v805 = vsel %vm803, %v804, %v802
    %v806 = vrsqrt.pop %v784
    %v807 = vmul.f32 %v784, %v806
    %vm808 = vcmp.eq.f32.partialorder %v784, inf
    %v809 = vsel %vm808, %v784, %v807
    %vm810 = vcmp.eq.f32.partialorder %v784, 0.0
    %v811 = vand.u32 %v784, 2147483648
    %v812 = vsel %vm810, %v811, %v809
    %v813 = vmax.f32 %v791, 1e-07
    %v814 = vmax.f32 %v798, 1e-07
    %v815 = vmax.f32 %v805, 1e-07
    %v816 = vmax.f32 %v812, 1e-07
    %v817 = vrcp.pop %v813
    %v818 = vmul.f32 1.0, %v817
    %v819 = vrcp.pop %v814
    %v820 = vmul.f32 1.0, %v819
    %v821 = vrcp.pop %v815
    %v822 = vmul.f32 1.0, %v821
    %v823 = vrcp.pop %v816
    %v824 = vmul.f32 1.0, %v823
    %v825 = vlaneseq
    %v826 = vshrl.u32 %v825, 7
    %v827 = vsub.s32 0, %v826
    %v828 = vrot.slane %v818, %v827
    %v829 = vlaneseq
    %v830 = vshrl.u32 %v829, 7
    %v831 = vsub.s32 0, %v830
    %v832 = vrot.slane %v820, %v831
    %v833 = vlaneseq
    %v834 = vshrl.u32 %v833, 7
    %v835 = vsub.s32 0, %v834
    %v836 = vrot.slane %v822, %v835
    %v837 = vlaneseq
    %v838 = vshrl.u32 %v837, 7
    %v839 = vsub.s32 0, %v838
    %v840 = vrot.slane %v824, %v839
    %v841 = vmul.f32 %v733, %v828
    %v842 = vmul.f32 %v734, %v832
    %v843 = vmul.f32 %v735, %v836
    %v844 = vmul.f32 %v736, %v840
    %v845 = vmul.f32 %v737, %v828
    %v846 = vmul.f32 %v738, %v832
    %v847 = vmul.f32 %v739, %v836
    %v848 = vmul.f32 %v740, %v840
    %v849 = vmul.f32 %v617, %v841
    %v850 = vmul.f32 %v618, %v842
    %v851 = vmul.f32 %v619, %v843
    %v852 = vmul.f32 %v620, %v844
    %v853 = vmul.f32 %v621, %v845
    %v854 = vmul.f32 %v622, %v846
    %v855 = vmul.f32 %v623, %v847
    %v856 = vmul.f32 %v624, %v848
    %v857 = vadd.f32 %v849, %v853
    %v858 = vrot.slane %v857, 4
    %v859 = vadd.f32 %v857, %v858
    %v860 = vrot.slane %v859, 2
    %v861 = vadd.f32 %v859, %v860
    %v862 = vrot.slane %v861, 1
    %v863 = vadd.f32 %v861, %v862
    %v864 = vadd.f32 %v850, %v854
    %v865 = vrot.slane %v864, 4
    %v866 = vadd.f32 %v864, %v865
    %v867 = vrot.slane %v866, 2
    %v868 = vadd.f32 %v866, %v867
    %v869 = vrot.slane %v868, 1
    %v870 = vadd.f32 %v868, %v869
    %v871 = vadd.f32 %v851, %v855
    %v872 = vrot.slane %v871, 4
    %v873 = vadd.f32 %v871, %v872
    %v874 = vrot.slane %v873, 2
    %v875 = vadd.f32 %v873, %v874
    %v876 = vrot.slane %v875, 1
    %v877 = vadd.f32 %v875, %v876
    %v878 = vadd.f32 %v852, %v856
    %v879 = vrot.slane %v878, 4
    %v880 = vadd.f32 %v878, %v879
    %v881 = vrot.slane %v880, 2
    %v882 = vadd.f32 %v880, %v881
    %v883 = vrot.slane %v882, 1
    %v884 = vadd.f32 %v882, %v883
    %v885 = vmul.f32 %v625, %v841
    %v886 = vmul.f32 %v626, %v842
    %v887 = vmul.f32 %v627, %v843
    %v888 = vmul.f32 %v628, %v844
    %v889 = vsub.f32 %v863, %v885
    %v890 = vsub.f32 %v870, %v886
    %v891 = vsub.f32 %v877, %v887
    %v892 = vsub.f32 %v884, %v888
    %v893 = vmul.f32 %v889, %v646
    %v894 = vmul.f32 %v890, %v648
    %v895 = vmul.f32 %v891, %v650
    %v896 = vmul.f32 %v892, %v652
    %v897 = vlaneseq
    %v898 = vshrl.u32 %v897, 7
    %v899 = vsub.s32 0, %v898
    %v900 = vrot.slane %v893, %v899
    %v901 = vlaneseq
    %v902 = vshrl.u32 %v901, 7
    %v903 = vsub.s32 0, %v902
    %v904 = vrot.slane %v894, %v903
    %v905 = vlaneseq
    %v906 = vshrl.u32 %v905, 7
    %v907 = vsub.s32 0, %v906
    %v908 = vrot.slane %v895, %v907
    %v909 = vlaneseq
    %v910 = vshrl.u32 %v909, 7
    %v911 = vsub.s32 0, %v910
    %v912 = vrot.slane %v896, %v911
    %v913 = vsel %vm75, %v900, %v841
    %v914 = vsel %vm75, %v904, %v842
    %v915 = vsel %vm75, %v908, %v843
    %v916 = vsel %vm75, %v912, %v844
    %v917 = vsel %vm76, %v900, %v845
    %v918 = vsel %vm76, %v904, %v846
    %v919 = vsel %vm76, %v908, %v847
    %v920 = vsel %vm76, %v912, %v848
    %v921 = vmul.f32 %v913, %v913
    %v922 = vmul.f32 %v914, %v914
    %v923 = vmul.f32 %v915, %v915
    %v924 = vmul.f32 %v916, %v916
    %v925 = vmul.f32 %v917, %v917
    %v926 = vmul.f32 %v918, %v918
    %v927 = vmul.f32 %v919, %v919
    %v928 = vmul.f32 %v920, %v920
    %v929 = vadd.f32 %v921, %v925
    %v930 = vrot.slane %v929, 4
    %v931 = vadd.f32 %v929, %v930
    %v932 = vrot.slane %v931, 2
    %v933 = vadd.f32 %v931, %v932
    %v934 = vrot.slane %v933, 1
    %v935 = vadd.f32 %v933, %v934
    %v936 = vadd.f32 %v922, %v926
    %v937 = vrot.slane %v936, 4
    %v938 = vadd.f32 %v936, %v937
    %v939 = vrot.slane %v938, 2
    %v940 = vadd.f32 %v938, %v939
    %v941 = vrot.slane %v940, 1
    %v942 = vadd.f32 %v940, %v941
    %v943 = vadd.f32 %v923, %v927
    %v944 = vrot.slane %v943, 4
    %v945 = vadd.f32 %v943, %v944
    %v946 = vrot.slane %v945, 2
    %v947 = vadd.f32 %v945, %v946
    %v948 = vrot.slane %v947, 1
    %v949 = vadd.f32 %v947, %v948
    %v950 = vadd.f32 %v924, %v928
    %v951 = vrot.slane %v950, 4
    %v952 = vadd.f32 %v950, %v951
    %v953 = vrot.slane %v952, 2
    %v954 = vadd.f32 %v952, %v953
    %v955 = vrot.slane %v954, 1
    %v956 = vadd.f32 %v954, %v955
    %v957 = vmul.f32 %v893, %v893
    %v958 = vmul.f32 %v894, %v894
    %v959 = vmul.f32 %v895, %v895
    %v960 = vmul.f32 %v896, %v896
    %v961 = vsub.f32 %v935, %v957
    %v962 = vsub.f32 %v942, %v958
    %v963 = vsub.f32 %v949, %v959
    %v964 = vsub.f32 %v956, %v960
    %vm965 = vcmp.gt.f32.partialorder %v961, %v957
    %vm966 = vcmp.gt.f32.partialorder %v962, %v958
    %vm967 = vcmp.gt.f32.partialorder %v963, %v959
    %vm968 = vcmp.gt.f32.partialorder %v964, %v960
    %v969 = vsub.f32 %v961, %v957
    %v970 = vsub.f32 %v962, %v958
    %v971 = vsub.f32 %v963, %v959
    %v972 = vsub.f32 %v964, %v960
    %v973 = vsel %vm965, %v961, %v969
    %v974 = vsel %vm966, %v962, %v970
    %v975 = vsel %vm967, %v963, %v971
    %v976 = vsel %vm968, %v964, %v972
    %v977 = vmax.f32 %v973, 1e-12
    %v978 = vmax.f32 %v974, 1e-12
    %v979 = vmax.f32 %v975, 1e-12
    %v980 = vmax.f32 %v976, 1e-12
    %v981 = vrsqrt.pop %v977
    %v982 = vmul.f32 %v977, %v981
    %vm983 = vcmp.eq.f32.partialorder %v977, inf
    %v984 = vsel %vm983, %v977, %v982
    %vm985 = vcmp.eq.f32.partialorder %v977, 0.0
    %v986 = vand.u32 %v977, 2147483648
    %v987 = vsel %vm985, %v986, %v984
    %v988 = vrsqrt.pop %v978
    %v989 = vmul.f32 %v978, %v988
    %vm990 = vcmp.eq.f32.partialorder %v978, inf
    %v991 = vsel %vm990, %v978, %v989
    %vm992 = vcmp.eq.f32.partialorder %v978, 0.0
    %v993 = vand.u32 %v978, 2147483648
    %v994 = vsel %vm992, %v993, %v991
    %v995 = vrsqrt.pop %v979
    %v996 = vmul.f32 %v979, %v995
    %vm997 = vcmp.eq.f32.partialorder %v979, inf
    %v998 = vsel %vm997, %v979, %v996
    %vm999 = vcmp.eq.f32.partialorder %v979, 0.0
    %v1000 = vand.u32 %v979, 2147483648
    %v1001 = vsel %vm999, %v1000, %v998
    %v1002 = vrsqrt.pop %v980
    %v1003 = vmul.f32 %v980, %v1002
    %vm1004 = vcmp.eq.f32.partialorder %v980, inf
    %v1005 = vsel %vm1004, %v980, %v1003
    %vm1006 = vcmp.eq.f32.partialorder %v980, 0.0
    %v1007 = vand.u32 %v980, 2147483648
    %v1008 = vsel %vm1006, %v1007, %v1005
    %v1009 = vmax.f32 %v987, 1e-07
    %v1010 = vmax.f32 %v994, 1e-07
    %v1011 = vmax.f32 %v1001, 1e-07
    %v1012 = vmax.f32 %v1008, 1e-07
    %v1013 = vrcp.pop %v1009
    %v1014 = vmul.f32 %v546, %v1013
    %v1015 = vrcp.pop %v1010
    %v1016 = vmul.f32 %v548, %v1015
    %v1017 = vrcp.pop %v1011
    %v1018 = vmul.f32 %v550, %v1017
    %v1019 = vrcp.pop %v1012
    %v1020 = vmul.f32 %v552, %v1019
    %v1021 = vmax.f32 %v1014, -5.0
    %v1022 = vmax.f32 %v1016, -5.0
    %v1023 = vmax.f32 %v1018, -5.0
    %v1024 = vmax.f32 %v1020, -5.0
    %v1025 = vmin.f32 %v1021, 5.0
    %v1026 = vmin.f32 %v1022, 5.0
    %v1027 = vmin.f32 %v1023, 5.0
    %v1028 = vmin.f32 %v1024, 5.0
    %v1029 = vlaneseq
    %v1030 = vshrl.u32 %v1029, 7
    %v1031 = vsub.s32 0, %v1030
    %v1032 = vrot.slane %v1025, %v1031
    %v1033 = vlaneseq
    %v1034 = vshrl.u32 %v1033, 7
    %v1035 = vsub.s32 0, %v1034
    %v1036 = vrot.slane %v1026, %v1035
    %v1037 = vlaneseq
    %v1038 = vshrl.u32 %v1037, 7
    %v1039 = vsub.s32 0, %v1038
    %v1040 = vrot.slane %v1027, %v1039
    %v1041 = vlaneseq
    %v1042 = vshrl.u32 %v1041, 7
    %v1043 = vsub.s32 0, %v1042
    %v1044 = vrot.slane %v1028, %v1043
    %v1045 = vmul.f32 %v1032, %v913
    %v1046 = vmul.f32 %v1036, %v914
    %v1047 = vmul.f32 %v1040, %v915
    %v1048 = vmul.f32 %v1044, %v916
    %v1049 = vmul.f32 %v1032, %v917
    %v1050 = vmul.f32 %v1036, %v918
    %v1051 = vmul.f32 %v1040, %v919
    %v1052 = vmul.f32 %v1044, %v920
    %v1053 = vmul.f32 %v1025, %v893
    %v1054 = vmul.f32 %v1026, %v894
    %v1055 = vmul.f32 %v1027, %v895
    %v1056 = vmul.f32 %v1028, %v896
    %v1057 = vmul.f32 %v617, %v1045
    %v1058 = vmul.f32 %v618, %v1046
    %v1059 = vmul.f32 %v619, %v1047
    %v1060 = vmul.f32 %v620, %v1048
    %v1061 = vmul.f32 %v621, %v1049
    %v1062 = vmul.f32 %v622, %v1050
    %v1063 = vmul.f32 %v623, %v1051
    %v1064 = vmul.f32 %v624, %v1052
    %v1065 = vadd.f32 %v1057, %v1061
    %v1066 = vrot.slane %v1065, 4
    %v1067 = vadd.f32 %v1065, %v1066
    %v1068 = vrot.slane %v1067, 2
    %v1069 = vadd.f32 %v1067, %v1068
    %v1070 = vrot.slane %v1069, 1
    %v1071 = vadd.f32 %v1069, %v1070
    %v1072 = vadd.f32 %v1058, %v1062
    %v1073 = vrot.slane %v1072, 4
    %v1074 = vadd.f32 %v1072, %v1073
    %v1075 = vrot.slane %v1074, 2
    %v1076 = vadd.f32 %v1074, %v1075
    %v1077 = vrot.slane %v1076, 1
    %v1078 = vadd.f32 %v1076, %v1077
    %v1079 = vadd.f32 %v1059, %v1063
    %v1080 = vrot.slane %v1079, 4
    %v1081 = vadd.f32 %v1079, %v1080
    %v1082 = vrot.slane %v1081, 2
    %v1083 = vadd.f32 %v1081, %v1082
    %v1084 = vrot.slane %v1083, 1
    %v1085 = vadd.f32 %v1083, %v1084
    %v1086 = vadd.f32 %v1060, %v1064
    %v1087 = vrot.slane %v1086, 4
    %v1088 = vadd.f32 %v1086, %v1087
    %v1089 = vrot.slane %v1088, 2
    %v1090 = vadd.f32 %v1088, %v1089
    %v1091 = vrot.slane %v1090, 1
    %v1092 = vadd.f32 %v1090, %v1091
    %v1093 = vmul.f32 %v625, %v1053
    %v1094 = vmul.f32 %v626, %v1054
    %v1095 = vmul.f32 %v627, %v1055
    %v1096 = vmul.f32 %v628, %v1056
    %v1097 = vsub.f32 %v1071, %v1093
    %v1098 = vsub.f32 %v1078, %v1094
    %v1099 = vsub.f32 %v1085, %v1095
    %v1100 = vsub.f32 %v1092, %v1096
    %vm1101 = vmand %vm641, %vm965
    %vm1102 = vmand %vm642, %vm966
    %vm1103 = vmand %vm643, %vm967
    %vm1104 = vmand %vm644, %vm968
    %v1105 = vsub.f32 %v1097, %v1093
    %v1106 = vsub.f32 %v1098, %v1094
    %v1107 = vsub.f32 %v1099, %v1095
    %v1108 = vsub.f32 %v1100, %v1096
    %v1109 = vsel %vm1101, %v1097, %v1105
    %v1110 = vsel %vm1102, %v1098, %v1106
    %v1111 = vsel %vm1103, %v1099, %v1107
    %v1112 = vsel %vm1104, %v1100, %v1108
    %v1113 = vlaneseq
    %v1114 = vshrl.u32 %v1113, 7
    %v1115 = vsub.s32 0, %v1114
    %v1116 = vrot.slane %v1109, %v1115
    %v1117 = vlaneseq
    %v1118 = vshrl.u32 %v1117, 7
    %v1119 = vsub.s32 0, %v1118
    %v1120 = vrot.slane %v1110, %v1119
    %v1121 = vlaneseq
    %v1122 = vshrl.u32 %v1121, 7
    %v1123 = vsub.s32 0, %v1122
    %v1124 = vrot.slane %v1111, %v1123
    %v1125 = vlaneseq
    %v1126 = vshrl.u32 %v1125, 7
    %v1127 = vsub.s32 0, %v1126
    %v1128 = vrot.slane %v1112, %v1127
    %v1129 = vmul.f32 %v1116, %v617
    %v1130 = vmul.f32 %v1120, %v618
    %v1131 = vmul.f32 %v1124, %v619
    %v1132 = vmul.f32 %v1128, %v620
    %v1133 = vmul.f32 %v1116, %v621
    %v1134 = vmul.f32 %v1120, %v622
    %v1135 = vmul.f32 %v1124, %v623
    %v1136 = vmul.f32 %v1128, %v624
    %v1137 = vadd.f32 %v1045, %v1129
    %v1138 = vadd.f32 %v1046, %v1130
    %v1139 = vadd.f32 %v1047, %v1131
    %v1140 = vadd.f32 %v1048, %v1132
    %v1141 = vadd.f32 %v1049, %v1133
    %v1142 = vadd.f32 %v1050, %v1134
    %v1143 = vadd.f32 %v1051, %v1135
    %v1144 = vadd.f32 %v1052, %v1136
    %v1145 = vmul.f32 %v1137, %v1137
    %v1146 = vmul.f32 %v1138, %v1138
    %v1147 = vmul.f32 %v1139, %v1139
    %v1148 = vmul.f32 %v1140, %v1140
    %v1149 = vmul.f32 %v1141, %v1141
    %v1150 = vmul.f32 %v1142, %v1142
    %v1151 = vmul.f32 %v1143, %v1143
    %v1152 = vmul.f32 %v1144, %v1144
    %v1153 = vadd.f32 %v1145, %v1149
    %v1154 = vrot.slane %v1153, 4
    %v1155 = vadd.f32 %v1153, %v1154
    %v1156 = vrot.slane %v1155, 2
    %v1157 = vadd.f32 %v1155, %v1156
    %v1158 = vrot.slane %v1157, 1
    %v1159 = vadd.f32 %v1157, %v1158
    %v1160 = vadd.f32 %v1146, %v1150
    %v1161 = vrot.slane %v1160, 4
    %v1162 = vadd.f32 %v1160, %v1161
    %v1163 = vrot.slane %v1162, 2
    %v1164 = vadd.f32 %v1162, %v1163
    %v1165 = vrot.slane %v1164, 1
    %v1166 = vadd.f32 %v1164, %v1165
    %v1167 = vadd.f32 %v1147, %v1151
    %v1168 = vrot.slane %v1167, 4
    %v1169 = vadd.f32 %v1167, %v1168
    %v1170 = vrot.slane %v1169, 2
    %v1171 = vadd.f32 %v1169, %v1170
    %v1172 = vrot.slane %v1171, 1
    %v1173 = vadd.f32 %v1171, %v1172
    %v1174 = vadd.f32 %v1148, %v1152
    %v1175 = vrot.slane %v1174, 4
    %v1176 = vadd.f32 %v1174, %v1175
    %v1177 = vrot.slane %v1176, 2
    %v1178 = vadd.f32 %v1176, %v1177
    %v1179 = vrot.slane %v1178, 1
    %v1180 = vadd.f32 %v1178, %v1179
    %v1181 = vsub.f32 %v1159, %v1145
    %v1182 = vsub.f32 %v1166, %v1146
    %v1183 = vsub.f32 %v1173, %v1147
    %v1184 = vsub.f32 %v1180, %v1148
    %v1185 = vmax.f32 %v1181, 0.0
    %v1186 = vmax.f32 %v1182, 0.0
    %v1187 = vmax.f32 %v1183, 0.0
    %v1188 = vmax.f32 %v1184, 0.0
    %v1189 = vrsqrt.pop %v1185
    %v1190 = vmul.f32 %v1185, %v1189
    %vm1191 = vcmp.eq.f32.partialorder %v1185, inf
    %v1192 = vsel %vm1191, %v1185, %v1190
    %vm1193 = vcmp.eq.f32.partialorder %v1185, 0.0
    %v1194 = vand.u32 %v1185, 2147483648
    %v1195 = vsel %vm1193, %v1194, %v1192
    %v1196 = vrsqrt.pop %v1186
    %v1197 = vmul.f32 %v1186, %v1196
    %vm1198 = vcmp.eq.f32.partialorder %v1186, inf
    %v1199 = vsel %vm1198, %v1186, %v1197
    %vm1200 = vcmp.eq.f32.partialorder %v1186, 0.0
    %v1201 = vand.u32 %v1186, 2147483648
    %v1202 = vsel %vm1200, %v1201, %v1199
    %v1203 = vrsqrt.pop %v1187
    %v1204 = vmul.f32 %v1187, %v1203
    %vm1205 = vcmp.eq.f32.partialorder %v1187, inf
    %v1206 = vsel %vm1205, %v1187, %v1204
    %vm1207 = vcmp.eq.f32.partialorder %v1187, 0.0
    %v1208 = vand.u32 %v1187, 2147483648
    %v1209 = vsel %vm1207, %v1208, %v1206
    %v1210 = vrsqrt.pop %v1188
    %v1211 = vmul.f32 %v1188, %v1210
    %vm1212 = vcmp.eq.f32.partialorder %v1188, inf
    %v1213 = vsel %vm1212, %v1188, %v1211
    %vm1214 = vcmp.eq.f32.partialorder %v1188, 0.0
    %v1215 = vand.u32 %v1188, 2147483648
    %v1216 = vsel %vm1214, %v1215, %v1213
    %v1217 = vmax.f32 %v1195, 1e-07
    %v1218 = vmax.f32 %v1202, 1e-07
    %v1219 = vmax.f32 %v1209, 1e-07
    %v1220 = vmax.f32 %v1216, 1e-07
    %v1221 = vrcp.pop %v1217
    %v1222 = vmul.f32 1.0, %v1221
    %v1223 = vrcp.pop %v1218
    %v1224 = vmul.f32 1.0, %v1223
    %v1225 = vrcp.pop %v1219
    %v1226 = vmul.f32 1.0, %v1225
    %v1227 = vrcp.pop %v1220
    %v1228 = vmul.f32 1.0, %v1227
    %v1229 = vlaneseq
    %v1230 = vshrl.u32 %v1229, 7
    %v1231 = vsub.s32 0, %v1230
    %v1232 = vrot.slane %v1222, %v1231
    %v1233 = vlaneseq
    %v1234 = vshrl.u32 %v1233, 7
    %v1235 = vsub.s32 0, %v1234
    %v1236 = vrot.slane %v1224, %v1235
    %v1237 = vlaneseq
    %v1238 = vshrl.u32 %v1237, 7
    %v1239 = vsub.s32 0, %v1238
    %v1240 = vrot.slane %v1226, %v1239
    %v1241 = vlaneseq
    %v1242 = vshrl.u32 %v1241, 7
    %v1243 = vsub.s32 0, %v1242
    %v1244 = vrot.slane %v1228, %v1243
    %v1245 = vmul.f32 %v1137, %v1232
    %v1246 = vmul.f32 %v1138, %v1236
    %v1247 = vmul.f32 %v1139, %v1240
    %v1248 = vmul.f32 %v1140, %v1244
    %v1249 = vmul.f32 %v1141, %v1232
    %v1250 = vmul.f32 %v1142, %v1236
    %v1251 = vmul.f32 %v1143, %v1240
    %v1252 = vmul.f32 %v1144, %v1244
    %v1253 = vmul.f32 %v617, %v1245
    %v1254 = vmul.f32 %v618, %v1246
    %v1255 = vmul.f32 %v619, %v1247
    %v1256 = vmul.f32 %v620, %v1248
    %v1257 = vmul.f32 %v621, %v1249
    %v1258 = vmul.f32 %v622, %v1250
    %v1259 = vmul.f32 %v623, %v1251
    %v1260 = vmul.f32 %v624, %v1252
    %v1261 = vadd.f32 %v1253, %v1257
    %v1262 = vrot.slane %v1261, 4
    %v1263 = vadd.f32 %v1261, %v1262
    %v1264 = vrot.slane %v1263, 2
    %v1265 = vadd.f32 %v1263, %v1264
    %v1266 = vrot.slane %v1265, 1
    %v1267 = vadd.f32 %v1265, %v1266
    %v1268 = vadd.f32 %v1254, %v1258
    %v1269 = vrot.slane %v1268, 4
    %v1270 = vadd.f32 %v1268, %v1269
    %v1271 = vrot.slane %v1270, 2
    %v1272 = vadd.f32 %v1270, %v1271
    %v1273 = vrot.slane %v1272, 1
    %v1274 = vadd.f32 %v1272, %v1273
    %v1275 = vadd.f32 %v1255, %v1259
    %v1276 = vrot.slane %v1275, 4
    %v1277 = vadd.f32 %v1275, %v1276
    %v1278 = vrot.slane %v1277, 2
    %v1279 = vadd.f32 %v1277, %v1278
    %v1280 = vrot.slane %v1279, 1
    %v1281 = vadd.f32 %v1279, %v1280
    %v1282 = vadd.f32 %v1256, %v1260
    %v1283 = vrot.slane %v1282, 4
    %v1284 = vadd.f32 %v1282, %v1283
    %v1285 = vrot.slane %v1284, 2
    %v1286 = vadd.f32 %v1284, %v1285
    %v1287 = vrot.slane %v1286, 1
    %v1288 = vadd.f32 %v1286, %v1287
    %v1289 = vmul.f32 %v625, %v1245
    %v1290 = vmul.f32 %v626, %v1246
    %v1291 = vmul.f32 %v627, %v1247
    %v1292 = vmul.f32 %v628, %v1248
    %v1293 = vsub.f32 %v1267, %v1289
    %v1294 = vsub.f32 %v1274, %v1290
    %v1295 = vsub.f32 %v1281, %v1291
    %v1296 = vsub.f32 %v1288, %v1292
    %v1297 = vmul.f32 %v1293, %v646
    %v1298 = vmul.f32 %v1294, %v648
    %v1299 = vmul.f32 %v1295, %v650
    %v1300 = vmul.f32 %v1296, %v652
    %v1301 = vlaneseq
    %v1302 = vshrl.u32 %v1301, 7
    %v1303 = vsub.s32 0, %v1302
    %v1304 = vrot.slane %v1297, %v1303
    %v1305 = vlaneseq
    %v1306 = vshrl.u32 %v1305, 7
    %v1307 = vsub.s32 0, %v1306
    %v1308 = vrot.slane %v1298, %v1307
    %v1309 = vlaneseq
    %v1310 = vshrl.u32 %v1309, 7
    %v1311 = vsub.s32 0, %v1310
    %v1312 = vrot.slane %v1299, %v1311
    %v1313 = vlaneseq
    %v1314 = vshrl.u32 %v1313, 7
    %v1315 = vsub.s32 0, %v1314
    %v1316 = vrot.slane %v1300, %v1315
    %v1317 = vsel %vm75, %v1304, %v1245
    %v1318 = vsel %vm75, %v1308, %v1246
    %v1319 = vsel %vm75, %v1312, %v1247
    %v1320 = vsel %vm75, %v1316, %v1248
    %v1321 = vsel %vm76, %v1304, %v1249
    %v1322 = vsel %vm76, %v1308, %v1250
    %v1323 = vsel %vm76, %v1312, %v1251
    %v1324 = vsel %vm76, %v1316, %v1252
    %v1325 = vsel %vm433, 1, 0
    %v1326 = vsel %vm434, 1, 0
    %v1327 = vsel %vm435, 1, 0
    %v1328 = vsel %vm436, 1, 0
    %vm1329 = vcmp.eq.s32.totalorder %v1325, 1
    %vm1330 = vcmp.eq.s32.totalorder %v1326, 1
    %vm1331 = vcmp.eq.s32.totalorder %v1327, 1
    %vm1332 = vcmp.eq.s32.totalorder %v1328, 1
    %v1333 = vsel %vm1329, 0.0, %v1317
    %v1334 = vsel %vm1330, 0.0, %v1318
    %v1335 = vsel %vm1331, 0.0, %v1319
    %v1336 = vsel %vm1332, 0.0, %v1320
    %v1337 = vsel %vm1329, 0.0, %v1321
    %v1338 = vsel %vm1330, 0.0, %v1322
    %v1339 = vsel %vm1331, 0.0, %v1323
    %v1340 = vsel %vm1332, 0.0, %v1324
    %v1341 = vld [vmem:[#allocation7] sm:$0xff]
    %v1342 = vld [vmem:[#allocation7 + $0x8] sm:$0xff]
    %vm1343 = vcmask 130048
    %v1345 = vsel %vm1343, %v1341, 0
    %v1348 = vsel %vm1343, %v1342, 0
    %1350 = vmatprep.subr.mxu0 %v1334
    %1351 = vmatpush1.msra.mxu0 %v1333
    %1352 = vmatprep.subr.mxu0 %v1338
    %1353 = vmatpush1.msra.mxu0 %v1337
    %1354 = vmatprep.subr.mxu0 0.0
    %1355 = vmatpush1.msra.mxu0 0.0
    %1356 = vmatprep.subr.mxu0 0.0
    %1357 = vmatpush1.msra.mxu0 0.0
    %1358 = vmatprep.subr.mxu0 0.0
    %1359 = vmatpush1.msra.mxu0 0.0
    %1360 = vmatprep.subr.mxu0 0.0
    %1361 = vmatpush1.msra.mxu0 0.0
    %1362 = vmatprep.subr.mxu0 0.0
    %1363 = vmatpush1.msra.mxu0 0.0
    %1364 = vmatprep.subr.mxu0 0.0
    %1365 = vmatpush1.msra.mxu0 0.0
    %1366 = vmatprep.subr.mxu0 0.0
    %1367 = vmatpush1.msra.mxu0 0.0
    %1368 = vmatprep.subr.mxu0 0.0
    %1369 = vmatpush1.msra.mxu0 0.0
    %1370 = vmatprep.subr.mxu0 0.0
    %1371 = vmatpush1.msra.mxu0 0.0
    %1372 = vmatprep.subr.mxu0 0.0
    %1373 = vmatpush1.msra.mxu0 0.0
    %1374 = vmatprep.subr.mxu0 0.0
    %1375 = vmatpush1.msra.mxu0 0.0
    %1376 = vmatprep.subr.mxu0 0.0
    %1377 = vmatpush1.msra.mxu0 0.0
    %1378 = vmatprep.subr.mxu0 0.0
    %1379 = vmatpush1.msra.mxu0 0.0
    %1380 = vmatprep.subr.mxu0 0.0
    %1381 = vmatpush1.msra.mxu0 0.0
    %1382 = vmatprep.subr.mxu0 0.0
    %1383 = vmatpush1.msra.mxu0 0.0
    %1384 = vmatprep.subr.mxu0 0.0
    %1385 = vmatpush1.msra.mxu0 0.0
    %1386 = vmatprep.subr.mxu0 0.0
    %1387 = vmatpush1.msra.mxu0 0.0
    %1388 = vmatprep.subr.mxu0 0.0
    %1389 = vmatpush1.msra.mxu0 0.0
    %1390 = vmatprep.subr.mxu0 0.0
    %1391 = vmatpush1.msra.mxu0 0.0
    %1392 = vmatprep.subr.mxu0 0.0
    %1393 = vmatpush1.msra.mxu0 0.0
    %1394 = vmatprep.subr.mxu0 0.0
    %1395 = vmatpush1.msra.mxu0 0.0
    %1396 = vmatprep.subr.mxu0 0.0
    %1397 = vmatpush1.msra.mxu0 0.0
    %1398 = vmatprep.subr.mxu0 0.0
    %1399 = vmatpush1.msra.mxu0 0.0
    %1400 = vmatprep.subr.mxu0 0.0
    %1401 = vmatpush1.msra.mxu0 0.0
    %1402 = vmatprep.subr.mxu0 0.0
    %1403 = vmatpush1.msra.mxu0 0.0
    %1404 = vmatprep.subr.mxu0 0.0
    %1405 = vmatpush1.msra.mxu0 0.0
    %1406 = vmatprep.subr.mxu0 0.0
    %1407 = vmatpush1.msra.mxu0 0.0
    %1408 = vmatprep.subr.mxu0 0.0
    %1409 = vmatpush1.msra.mxu0 0.0
    %1410 = vmatprep.subr.mxu0 0.0
    %1411 = vmatpush1.msra.mxu0 0.0
    %1412 = vmatprep.subr.mxu0 0.0
    %1413 = vmatpush1.msra.mxu0 0.0
    %1414 = vmatprep.mubr.f32.mxu0 0.0
    %1415 = vmatmul.mubr.f32.gmra.mrb[0].mxu0 %v1345
    %v1416 = vpop.f32.mrb[0].mxu0
    %v1417 = vadd.f32 0.0, %v1416
    %v1418 = vpop.f32.mrb[0].mxu0
    %v1419 = vadd.f32 0.0, %v1418
    %1420 = vmatprep.mubr.f32.mxu0 0.0
    %1421 = vmatmul.mubr.f32.gmra.mrb[0].mxu0 %v1348
    %v1422 = vpop.f32.mrb[0].mxu0
    %v1423 = vadd.f32 0.0, %v1422
    %v1424 = vpop.f32.mrb[0].mxu0
    %v1425 = vadd.f32 0.0, %v1424
    %1426 = vdwg.mxu0
    %1427 = vmatprep.subr.mxu0 %v1336
    %1428 = vmatpush1.msra.mxu0 %v1335
    %1429 = vmatprep.subr.mxu0 %v1340
    %1430 = vmatpush1.msra.mxu0 %v1339
    %1431 = vmatprep.subr.mxu0 0.0
    %1432 = vmatpush1.msra.mxu0 0.0
    %1433 = vmatprep.subr.mxu0 0.0
    %1434 = vmatpush1.msra.mxu0 0.0
    %1435 = vmatprep.subr.mxu0 0.0
    %1436 = vmatpush1.msra.mxu0 0.0
    %1437 = vmatprep.subr.mxu0 0.0
    %1438 = vmatpush1.msra.mxu0 0.0
    %1439 = vmatprep.subr.mxu0 0.0
    %1440 = vmatpush1.msra.mxu0 0.0
    %1441 = vmatprep.subr.mxu0 0.0
    %1442 = vmatpush1.msra.mxu0 0.0
    %1443 = vmatprep.subr.mxu0 0.0
    %1444 = vmatpush1.msra.mxu0 0.0
    %1445 = vmatprep.subr.mxu0 0.0
    %1446 = vmatpush1.msra.mxu0 0.0
    %1447 = vmatprep.subr.mxu0 0.0
    %1448 = vmatpush1.msra.mxu0 0.0
    %1449 = vmatprep.subr.mxu0 0.0
    %1450 = vmatpush1.msra.mxu0 0.0
    %1451 = vmatprep.subr.mxu0 0.0
    %1452 = vmatpush1.msra.mxu0 0.0
    %1453 = vmatprep.subr.mxu0 0.0
    %1454 = vmatpush1.msra.mxu0 0.0
    %1455 = vmatprep.subr.mxu0 0.0
    %1456 = vmatpush1.msra.mxu0 0.0
    %1457 = vmatprep.subr.mxu0 0.0
    %1458 = vmatpush1.msra.mxu0 0.0
    %1459 = vmatprep.subr.mxu0 0.0
    %1460 = vmatpush1.msra.mxu0 0.0
    %1461 = vmatprep.subr.mxu0 0.0
    %1462 = vmatpush1.msra.mxu0 0.0
    %1463 = vmatprep.subr.mxu0 0.0
    %1464 = vmatpush1.msra.mxu0 0.0
    %1465 = vmatprep.subr.mxu0 0.0
    %1466 = vmatpush1.msra.mxu0 0.0
    %1467 = vmatprep.subr.mxu0 0.0
    %1468 = vmatpush1.msra.mxu0 0.0
    %1469 = vmatprep.subr.mxu0 0.0
    %1470 = vmatpush1.msra.mxu0 0.0
    %1471 = vmatprep.subr.mxu0 0.0
    %1472 = vmatpush1.msra.mxu0 0.0
    %1473 = vmatprep.subr.mxu0 0.0
    %1474 = vmatpush1.msra.mxu0 0.0
    %1475 = vmatprep.subr.mxu0 0.0
    %1476 = vmatpush1.msra.mxu0 0.0
    %1477 = vmatprep.subr.mxu0 0.0
    %1478 = vmatpush1.msra.mxu0 0.0
    %1479 = vmatprep.subr.mxu0 0.0
    %1480 = vmatpush1.msra.mxu0 0.0
    %1481 = vmatprep.subr.mxu0 0.0
    %1482 = vmatpush1.msra.mxu0 0.0
    %1483 = vmatprep.subr.mxu0 0.0
    %1484 = vmatpush1.msra.mxu0 0.0
    %1485 = vmatprep.subr.mxu0 0.0
    %1486 = vmatpush1.msra.mxu0 0.0
    %1487 = vmatprep.subr.mxu0 0.0
    %1488 = vmatpush1.msra.mxu0 0.0
    %1489 = vmatprep.subr.mxu0 0.0
    %1490 = vmatpush1.msra.mxu0 0.0
    %1491 = vmatprep.mubr.f32.mxu0 0.0
    %1492 = vmatmul.mubr.f32.gmra.mrb[0].mxu0 %v1345
    %v1493 = vpop.f32.mrb[0].mxu0
    %v1494 = vadd.f32 0.0, %v1493
    %v1495 = vpop.f32.mrb[0].mxu0
    %v1496 = vadd.f32 0.0, %v1495
    %1497 = vmatprep.mubr.f32.mxu0 0.0
    %1498 = vmatmul.mubr.f32.gmra.mrb[0].mxu0 %v1348
    %v1499 = vpop.f32.mrb[0].mxu0
    %v1500 = vadd.f32 0.0, %v1499
    %v1501 = vpop.f32.mrb[0].mxu0
    %v1502 = vadd.f32 0.0, %v1501
    %1503 = vdwg.mxu0
    %v1504 = vmul.f32 %v1417, %v1333
    %v1505 = vmul.f32 %v1419, %v1334
    %v1506 = vmul.f32 %v1494, %v1335
    %v1507 = vmul.f32 %v1496, %v1336
    %v1508 = vmul.f32 %v1423, %v1337
    %v1509 = vmul.f32 %v1425, %v1338
    %v1510 = vmul.f32 %v1500, %v1339
    %v1511 = vmul.f32 %v1502, %v1340
    %v1512 = vadd.f32 %v1504, %v1508
    %v1513 = vrot.slane %v1512, 4
    %v1514 = vadd.f32 %v1512, %v1513
    %v1515 = vrot.slane %v1514, 2
    %v1516 = vadd.f32 %v1514, %v1515
    %v1517 = vrot.slane %v1516, 1
    %v1518 = vadd.f32 %v1516, %v1517
    %v1519 = vadd.f32 %v1505, %v1509
    %v1520 = vrot.slane %v1519, 4
    %v1521 = vadd.f32 %v1519, %v1520
    %v1522 = vrot.slane %v1521, 2
    %v1523 = vadd.f32 %v1521, %v1522
    %v1524 = vrot.slane %v1523, 1
    %v1525 = vadd.f32 %v1523, %v1524
    %v1526 = vadd.f32 %v1506, %v1510
    %v1527 = vrot.slane %v1526, 4
    %v1528 = vadd.f32 %v1526, %v1527
    %v1529 = vrot.slane %v1528, 2
    %v1530 = vadd.f32 %v1528, %v1529
    %v1531 = vrot.slane %v1530, 1
    %v1532 = vadd.f32 %v1530, %v1531
    %v1533 = vadd.f32 %v1507, %v1511
    %v1534 = vrot.slane %v1533, 4
    %v1535 = vadd.f32 %v1533, %v1534
    %v1536 = vrot.slane %v1535, 2
    %v1537 = vadd.f32 %v1535, %v1536
    %v1538 = vrot.slane %v1537, 1
    %v1539 = vadd.f32 %v1537, %v1538
    %v1540 = vand.u32 2147483647, %v1518
    %v1541 = vand.u32 2147483647, %v1525
    %v1542 = vand.u32 2147483647, %v1532
    %v1543 = vand.u32 2147483647, %v1539
    %v1544 = vrsqrt.pop %v1540
    %v1545 = vmul.f32 %v1540, %v1544
    %vm1546 = vcmp.eq.f32.partialorder %v1540, inf
    %v1547 = vsel %vm1546, %v1540, %v1545
    %vm1548 = vcmp.eq.f32.partialorder %v1540, 0.0
    %v1549 = vand.u32 %v1540, 2147483648
    %v1550 = vsel %vm1548, %v1549, %v1547
    %v1551 = vrsqrt.pop %v1541
    %v1552 = vmul.f32 %v1541, %v1551
    %vm1553 = vcmp.eq.f32.partialorder %v1541, inf
    %v1554 = vsel %vm1553, %v1541, %v1552
    %vm1555 = vcmp.eq.f32.partialorder %v1541, 0.0
    %v1556 = vand.u32 %v1541, 2147483648
    %v1557 = vsel %vm1555, %v1556, %v1554
    %v1558 = vrsqrt.pop %v1542
    %v1559 = vmul.f32 %v1542, %v1558
    %vm1560 = vcmp.eq.f32.partialorder %v1542, inf
    %v1561 = vsel %vm1560, %v1542, %v1559
    %vm1562 = vcmp.eq.f32.partialorder %v1542, 0.0
    %v1563 = vand.u32 %v1542, 2147483648
    %v1564 = vsel %vm1562, %v1563, %v1561
    %v1565 = vrsqrt.pop %v1543
    %v1566 = vmul.f32 %v1543, %v1565
    %vm1567 = vcmp.eq.f32.partialorder %v1543, inf
    %v1568 = vsel %vm1567, %v1543, %v1566
    %vm1569 = vcmp.eq.f32.partialorder %v1543, 0.0
    %v1570 = vand.u32 %v1543, 2147483648
    %v1571 = vsel %vm1569, %v1570, %v1568
    %v1576 = vcombine.low %v1550, %v1557
    %v1577 = vcombine.low %v1564, %v1571
    %v1579 = vunpack.c.l.s4 1966171168
    %v1580 = vunpack.c.0.s8 %v1579
    %v1581 = vlaneseq
    %v1582 = vshrl.u32 %v1581, 7
    %v1583 = vsub.s32 %v1580, %v1582
    %v1584 = vrot.slane %v1576, %v1583
    %v1586 = vunpack.c.l.s4 1966171168
    %v1587 = vunpack.c.0.s8 %v1586
    %v1588 = vlaneseq
    %v1589 = vshrl.u32 %v1588, 7
    %v1590 = vsub.s32 %v1587, %v1589
    %v1591 = vrot.slane %v1577, %v1590
    %v1592 = vcombine.low %v1584, %v1591
    %v1594 = vunpack.c.l.s4 1966171168
    %v1595 = vunpack.c.0.s8 %v1594
    %v1596 = vlaneseq
    %v1597 = vshrl.u32 %v1596, 7
    %v1598 = vsub.s32 %v1595, %v1597
    %v1599 = vrot.slane %v1592, %v1598
    %v1601 = vlaneseq
    %vm1602 = vcmp.ge.s32.totalorder %v1601, 0
    %vm1603 = vcmp.lt.s32.totalorder %v1601, 512
    %vm1604 = vmand %vm1602, %vm1603
    %1605 = vst.msk [vmem:[#allocation8] sm:$0xf] %vm1604, %v1599
    // Predicated region
    $region26: #{tpu_custom_call.1} parent=1 // pred_check
      _
    $region27: #{tpu_custom_call.1} parent=1 // pred_check_branch
      %1607 = sbr.rel (0) target = $region29
    $region28: #{tpu_custom_call.1} parent=1 // pred_region
      %s1609 = ssub.s32 64, 64
      %1610 = vsyncadd [#allocation4], %s1609
      %s1612 = sshll.u32 [#allocation8], 4
      %s1613 = int_to_ptr.vmem [resolvable:$true] %s1612
      %1615 = dma.vmem_to_hbm [thread:$0]  %s1613, 64, %s3, [#allocation4]
    $region29: #{tpu_custom_call.1} parent=1 // pred_fallthru
      _
    // Predicated region
    $region30: #{tpu_custom_call.1} parent=1 // pred_check
      _
    $region31: #{tpu_custom_call.1} parent=1 // pred_check_branch
      %1617 = sbr.rel (0) target = $region33
    $region32: #{tpu_custom_call.1} parent=1 // pred_region
      %1618 = dma.done [#allocation4], 64
    $region33: #{tpu_custom_call.1} parent=1 // pred_fallthru
      _
    %1619 = vsyncpa [#allocation3], 1
    %1620 = vsyncpa [#allocation6], 1
    %1621 = vsyncpa [#allocation4], 1

</llo_original>
